<compile_context>
chip_gen: v7x
topology: tpu7x:2x2x1
jax: 0.10.0
libtpu: 0.0.40
codegen_flags: <defaults>
</compile_context>

<pallas_src>
import functools

import jax
import jax.numpy as jnp
from jax.experimental import pallas as pl
from jax.experimental.pallas import tpu as pltpu


def _round_up(x: int, m: int) -> int:
    return ((x + m - 1) // m) * m


def _choose_tile_b(batch: int, d_in: int, out_dim: int) -> int:
    """Pick the batch tile.

    The kernel is overhead/bandwidth dominated, so we want the largest tile that
      (a) still leaves ~4 grid steps when the batch allows it (2 pipelined steps per
          TensorCore under megacore "parallel" sharding on v7x), and
      (b) fits a conservative per-step VMEM budget that is safe on every generation
          (v7x: 64 MiB physical; v5e: 16 MiB *scoped* default, raised via vmem_limit_bytes).
    There is no MXU-driven row floor (the MXU streams 8 rows per push), so the only hard
    constraint is a multiple of 8.
    """

    def footprint(t):
        return (2 * t * d_in * 4                     # double-buffered f32 x tile
                + t * d_in * 2                       # in-kernel bf16 copy of the x tile
                + t * (128 + 64 + 32) * (4 + 2)      # f32 accumulators + bf16 activations
                + 2 * t * max(out_dim, 1) * 4)       # double-buffered f32 out tile

    budget = 16 * 1024 * 1024                        # safe under the 32 MiB scoped limit

    tile = max(8, _round_up(-(-batch // 4), 8))      # aim for ~4 grid steps
    tile = min(tile, 8192)                           # per-step overhead fully amortized
    while tile > 8 and footprint(tile) > budget:
        tile = max(8, _round_up(tile // 2, 8))
    return tile


def _mlp_kernel(x_ref, w1_ref, b1_ref, w2_ref, b2_ref, w3_ref, b3_ref,
                w4_ref, b4_ref, out_ref, *, out_dim: int):
    # f32 -> bf16 cast happens here (VPU slack); the wrapper never materializes a bf16
    # or padded copy of x in HBM.
    x = x_ref[...].astype(jnp.bfloat16)

    # Layer 1: [TB, D_in](bf16) @ [D_in, 128](bf16) -> f32 accum, bias+ReLU in f32.
    h = jnp.dot(x, w1_ref[...], preferred_element_type=jnp.float32)
    h = jnp.maximum(h + b1_ref[...], 0.0).astype(jnp.bfloat16)
    # Layer 2: [TB, 128] @ [128, 64]
    h = jnp.dot(h, w2_ref[...], preferred_element_type=jnp.float32)
    h = jnp.maximum(h + b2_ref[...], 0.0).astype(jnp.bfloat16)
    # Layer 3: [TB, 64] @ [64, 32]
    h = jnp.dot(h, w3_ref[...], preferred_element_type=jnp.float32)
    h = jnp.maximum(h + b3_ref[...], 0.0)            # keep f32 for the head

    if out_dim == 1:
        # Single-logit head: an N=1 MXU matmul would use <1% of the MXU N dimension and
        # still pay a full push + result drain.  VPU multiply + lane reduction instead.
        w4_row = w4_ref[...].astype(jnp.float32)      # (1, 32) broadcast row
        logits = jnp.sum(h * w4_row, axis=-1, keepdims=True) + b4_ref[...]
    else:
        logits = jnp.dot(h.astype(jnp.bfloat16), w4_ref[...],
                         preferred_element_type=jnp.float32) + b4_ref[...]
    out_ref[...] = logits.astype(out_ref.dtype)


def anomaly_detector_forward(x, params, *, tile_b=None):
    """x: [B, input_dim] float32.  params: w1..w4 stored [in, out], b1..b4 [1, out]."""
    B, d_in = x.shape
    out_dim = params["w4"].shape[1]

    if tile_b is None:
        tile_b = _choose_tile_b(B, d_in, out_dim)
    tile_b = max(8, _round_up(tile_b, 8))

    grid = (pl.cdiv(B, tile_b),)   # ragged last block handled by Pallas partial-block rules

    # Weights/biases are tiny (~60 KB); cast once in the wrapper so the MXU gets native
    # bf16 and the resident VMEM blocks stay small.  Biases stay f32.
    w1 = params["w1"].astype(jnp.bfloat16)
    w2 = params["w2"].astype(jnp.bfloat16)
    w3 = params["w3"].astype(jnp.bfloat16)
    w4 = (params["w4"].T if out_dim == 1 else params["w4"]).astype(jnp.bfloat16)
    b1 = params["b1"].astype(jnp.float32)
    b2 = params["b2"].astype(jnp.float32)
    b3 = params["b3"].astype(jnp.float32)
    b4 = params["b4"].astype(jnp.float32)

    def resident(arr):
        # Constant block index -> Pallas fetches the block once and keeps it resident in
        # VMEM across all grid steps (no per-step re-DMA of the weights).
        return pl.BlockSpec(arr.shape, lambda i: (0, 0))

    in_specs = [
        pl.BlockSpec((tile_b, d_in), lambda i: (i, 0)),   # pipelined f32 x tile
        resident(w1), resident(b1),
        resident(w2), resident(b2),
        resident(w3), resident(b3),
        resident(w4), resident(b4),
    ]
    out_specs = pl.BlockSpec((tile_b, out_dim), lambda i: (i, 0))

    layer_macs = d_in * 128 + 128 * 64 + 64 * 32 + 32 * out_dim
    cost = pl.CostEstimate(
        flops=2 * B * layer_macs,
        transcendentals=0,
        bytes_accessed=(B * d_in * 4 + B * out_dim * 4
                        + 2 * layer_macs + 4 * (128 + 64 + 32 + out_dim)),
    )

    return pl.pallas_call(
        functools.partial(_mlp_kernel, out_dim=out_dim),
        out_shape=jax.ShapeDtypeStruct((B, out_dim), jnp.float32),
        grid_spec=pltpu.PrefetchScalarGridSpec(
            num_scalar_prefetch=0,
            grid=grid,
            in_specs=in_specs,
            out_specs=out_specs,
        ),
        compiler_params=pltpu.CompilerParams(
            dimension_semantics=("parallel",),
            # Raises v5e's 16 MiB scoped default; equals the v6e/v7x default and stays
            # well under v7x's 64 MiB physical VMEM (per-step footprint <= 16 MiB).
            vmem_limit_bytes=32 * 1024 * 1024,
        ),
        cost_estimate=cost,
    )(x.astype(jnp.float32), w1, b1, w2, b2, w3, b3, w4, b4)


def init_params(key, input_dim, num_classes):
    """PyTorch-style Linear init; weights stored transposed as [in_features, out_features]."""
    dims = [input_dim, 128, 64, 32, 1 if num_classes == 2 else num_classes]
    params = {}
    keys = jax.random.split(key, 8)
    for li in range(4):
        fan_in, fan_out = dims[li], dims[li + 1]
        bound = 1.0 / jnp.sqrt(fan_in)
        params[f"w{li + 1}"] = jax.random.uniform(
            keys[2 * li], (fan_in, fan_out), minval=-bound, maxval=bound, dtype=jnp.float32)
        params[f"b{li + 1}"] = jax.random.uniform(
            keys[2 * li + 1], (1, fan_out), minval=-bound, maxval=bound, dtype=jnp.float32)
    return params


def reference_forward(x, params):
    """f32 reference on the same bf16-quantized x/weights the kernel's MXU path consumes
    (remaining deltas vs. the kernel are only its bf16 intermediate casts)."""
    q = lambda a: a.astype(jnp.bfloat16).astype(jnp.float32)
    h = jnp.maximum(q(x) @ q(params["w1"]) + params["b1"], 0.0)
    h = jnp.maximum(h @ q(params["w2"]) + params["b2"], 0.0)
    h = jnp.maximum(h @ q(params["w3"]) + params["b3"], 0.0)
    return h @ q(params["w4"]) + params["b4"]


if __name__ == "__main__":
    key = jax.random.PRNGKey(0)
    k_p1, k_x1, k_p2, k_x2 = jax.random.split(key, 4)

    input_dim = 32

    # Case 1: binary head (num_classes == 2 -> single logit).  B=1024 with tile_b=256
    # gives a 4-step grid: 2 pipelined steps per TensorCore under megacore sharding.
    params_bin = init_params(k_p1, input_dim, num_classes=2)
    x_bin = jax.random.normal(k_x1, (1024, input_dim), dtype=jnp.float32)
    out_bin = jax.block_until_ready(anomaly_detector_forward(x_bin, params_bin))
    ref_bin = reference_forward(x_bin, params_bin)
    assert out_bin.shape == (1024, 1)
    assert jnp.allclose(out_bin, ref_bin, atol=5e-2, rtol=5e-2), "binary-head mismatch"

    # Case 2: multi-class head with a batch that is not a multiple of the tile
    # (exercises the ragged last block: OOB rows are never written back, no wrapper pad).
    params_mc = init_params(k_p2, input_dim, num_classes=5)
    x_mc = jax.random.normal(k_x2, (300, input_dim), dtype=jnp.float32)
    out_mc = jax.block_until_ready(anomaly_detector_forward(x_mc, params_mc))
    ref_mc = reference_forward(x_mc, params_mc)
    assert out_mc.shape == (300, 5)
    assert jnp.allclose(out_mc, ref_mc, atol=5e-2, rtol=5e-2), "multi-class mismatch"

    print("KERNEL_OK")
</pallas_src>

<mosaic_0001>
module attributes {stable_mosaic.version = 11 : i64} {
  func.func @_mlp_kernel(%arg0: i32, %arg1: memref<256x32xf32, #tpu.memory_space<vmem>>, %arg2: memref<32x128xbf16, #tpu.memory_space<vmem>>, %arg3: memref<1x128xf32, #tpu.memory_space<vmem>>, %arg4: memref<128x64xbf16, #tpu.memory_space<vmem>>, %arg5: memref<1x64xf32, #tpu.memory_space<vmem>>, %arg6: memref<64x32xbf16, #tpu.memory_space<vmem>>, %arg7: memref<1x32xf32, #tpu.memory_space<vmem>>, %arg8: memref<1x32xbf16, #tpu.memory_space<vmem>>, %arg9: memref<1x1xf32, #tpu.memory_space<vmem>>, %arg10: memref<256x1xf32, #tpu.memory_space<vmem>>) attributes {dimension_semantics = [#tpu.dimension_semantics<parallel>], iteration_bounds = array<i64: 4>, scalar_prefetch = 0 : i64, scratch_operands = 0 : i64, tpu.core_type = #tpu.core_type<tc>, window_params = [{transform_indices = @transform_0, window_bounds = array<i64: 256, 32>}, {pipeline_mode = #tpu.pipeline_mode<synchronous>, transform_indices = @transform_1, window_bounds = array<i64: 32, 128>}, {pipeline_mode = #tpu.pipeline_mode<synchronous>, transform_indices = @transform_2, window_bounds = array<i64: 1, 128>}, {pipeline_mode = #tpu.pipeline_mode<synchronous>, transform_indices = @transform_3, window_bounds = array<i64: 128, 64>}, {pipeline_mode = #tpu.pipeline_mode<synchronous>, transform_indices = @transform_4, window_bounds = array<i64: 1, 64>}, {pipeline_mode = #tpu.pipeline_mode<synchronous>, transform_indices = @transform_5, window_bounds = array<i64: 64, 32>}, {pipeline_mode = #tpu.pipeline_mode<synchronous>, transform_indices = @transform_6, window_bounds = array<i64: 1, 32>}, {pipeline_mode = #tpu.pipeline_mode<synchronous>, transform_indices = @transform_7, window_bounds = array<i64: 1, 32>}, {pipeline_mode = #tpu.pipeline_mode<synchronous>, transform_indices = @transform_8, window_bounds = array<i64: 1, 1>}, {transform_indices = @transform_9, window_bounds = array<i64: 256, 1>}]} {
    %c0 = arith.constant 0 : index
    %c0_0 = arith.constant 0 : index
    %0 = vector.load %arg1[%c0, %c0_0] : memref<256x32xf32, #tpu.memory_space<vmem>>, vector<256x32xf32>
    %1 = arith.truncf %0 : vector<256x32xf32> to vector<256x32xbf16>
    %c0_1 = arith.constant 0 : index
    %c0_2 = arith.constant 0 : index
    %2 = vector.load %arg2[%c0_1, %c0_2] : memref<32x128xbf16, #tpu.memory_space<vmem>>, vector<32x128xbf16>
    %cst = arith.constant dense<0.000000e+00> : vector<256x128xf32>
    %3 = tpu.matmul %1, %2, %cst {dimension_numbers = #tpu.dot_dimension_numbers<[1], [0], [0], [1], [0, 0, 1, 1], [], []>} : vector<256x32xbf16>, vector<32x128xbf16>, vector<256x128xf32> -> vector<256x128xf32>
    %c0_3 = arith.constant 0 : index
    %c0_4 = arith.constant 0 : index
    %4 = vector.load %arg3[%c0_3, %c0_4] : memref<1x128xf32, #tpu.memory_space<vmem>>, vector<1x128xf32>
    %5 = vector.broadcast %4 : vector<1x128xf32> to vector<256x128xf32>
    %6 = arith.addf %3, %5 : vector<256x128xf32>
    %cst_5 = arith.constant 0.000000e+00 : f32
    %7 = vector.broadcast %cst_5 : f32 to vector<256x128xf32>
    %8 = arith.maximumf %6, %7 : vector<256x128xf32>
    %9 = arith.truncf %8 : vector<256x128xf32> to vector<256x128xbf16>
    %c0_6 = arith.constant 0 : index
    %c0_7 = arith.constant 0 : index
    %10 = vector.load %arg4[%c0_6, %c0_7] : memref<128x64xbf16, #tpu.memory_space<vmem>>, vector<128x64xbf16>
    %cst_8 = arith.constant dense<0.000000e+00> : vector<256x64xf32>
    %11 = tpu.matmul %9, %10, %cst_8 {dimension_numbers = #tpu.dot_dimension_numbers<[1], [0], [0], [1], [0, 0, 1, 1], [], []>} : vector<256x128xbf16>, vector<128x64xbf16>, vector<256x64xf32> -> vector<256x64xf32>
    %c0_9 = arith.constant 0 : index
    %c0_10 = arith.constant 0 : index
    %12 = vector.load %arg5[%c0_9, %c0_10] : memref<1x64xf32, #tpu.memory_space<vmem>>, vector<1x64xf32>
    %13 = vector.broadcast %12 : vector<1x64xf32> to vector<256x64xf32>
    %14 = arith.addf %11, %13 : vector<256x64xf32>
    %cst_11 = arith.constant 0.000000e+00 : f32
    %15 = vector.broadcast %cst_11 : f32 to vector<256x64xf32>
    %16 = arith.maximumf %14, %15 : vector<256x64xf32>
    %17 = arith.truncf %16 : vector<256x64xf32> to vector<256x64xbf16>
    %c0_12 = arith.constant 0 : index
    %c0_13 = arith.constant 0 : index
    %18 = vector.load %arg6[%c0_12, %c0_13] : memref<64x32xbf16, #tpu.memory_space<vmem>>, vector<64x32xbf16>
    %cst_14 = arith.constant dense<0.000000e+00> : vector<256x32xf32>
    %19 = tpu.matmul %17, %18, %cst_14 {dimension_numbers = #tpu.dot_dimension_numbers<[1], [0], [0], [1], [0, 0, 1, 1], [], []>} : vector<256x64xbf16>, vector<64x32xbf16>, vector<256x32xf32> -> vector<256x32xf32>
    %c0_15 = arith.constant 0 : index
    %c0_16 = arith.constant 0 : index
    %20 = vector.load %arg7[%c0_15, %c0_16] : memref<1x32xf32, #tpu.memory_space<vmem>>, vector<1x32xf32>
    %21 = vector.broadcast %20 : vector<1x32xf32> to vector<256x32xf32>
    %22 = arith.addf %19, %21 : vector<256x32xf32>
    %cst_17 = arith.constant 0.000000e+00 : f32
    %23 = vector.broadcast %cst_17 : f32 to vector<256x32xf32>
    %24 = arith.maximumf %22, %23 : vector<256x32xf32>
    %c0_18 = arith.constant 0 : index
    %c0_19 = arith.constant 0 : index
    %25 = vector.load %arg8[%c0_18, %c0_19] : memref<1x32xbf16, #tpu.memory_space<vmem>>, vector<1x32xbf16>
    %26 = arith.extf %25 : vector<1x32xbf16> to vector<1x32xf32>
    %27 = vector.broadcast %26 : vector<1x32xf32> to vector<256x32xf32>
    %28 = arith.mulf %24, %27 : vector<256x32xf32>
    %cst_20 = arith.constant dense<0.000000e+00> : vector<256xf32>
    %29 = vector.multi_reduction <add>, %28, %cst_20 [1] : vector<256x32xf32> to vector<256xf32>
    %30 = vector.shape_cast %29 : vector<256xf32> to vector<256x1xf32>
    %c0_21 = arith.constant 0 : index
    %c0_22 = arith.constant 0 : index
    %31 = vector.load %arg9[%c0_21, %c0_22] : memref<1x1xf32, #tpu.memory_space<vmem>>, vector<1x1xf32>
    %32 = vector.broadcast %31 : vector<1x1xf32> to vector<256x1xf32>
    %33 = arith.addf %30, %32 : vector<256x1xf32>
    %c0_23 = arith.constant 0 : index
    %c0_24 = arith.constant 0 : index
    %34 = vector.load %arg10[%c0_23, %c0_24] : memref<256x1xf32, #tpu.memory_space<vmem>>, vector<256x1xf32>
    tpu.vector_store %arg10[%c0_23, %c0_24], %33 {strides = array<i32>} : memref<256x1xf32, #tpu.memory_space<vmem>>, vector<256x1xf32>,
    return
  }
  func.func @transform_0(%arg0: i32) -> (i32, i32) {
    %c0_i32 = arith.constant 0 : i32
    %c0_i32_0 = arith.constant 0 : i32
    return %arg0, %c0_i32 : i32, i32
  }
  func.func @transform_1(%arg0: i32) -> (i32, i32) {
    %c0_i32 = arith.constant 0 : i32
    %c0_i32_0 = arith.constant 0 : i32
    %c0_i32_1 = arith.constant 0 : i32
    return %c0_i32, %c0_i32_0 : i32, i32
  }
  func.func @transform_2(%arg0: i32) -> (i32, i32) {
    %c0_i32 = arith.constant 0 : i32
    %c0_i32_0 = arith.constant 0 : i32
    %c0_i32_1 = arith.constant 0 : i32
    return %c0_i32, %c0_i32_0 : i32, i32
  }
  func.func @transform_3(%arg0: i32) -> (i32, i32) {
    %c0_i32 = arith.constant 0 : i32
    %c0_i32_0 = arith.constant 0 : i32
    %c0_i32_1 = arith.constant 0 : i32
    return %c0_i32, %c0_i32_0 : i32, i32
  }
  func.func @transform_4(%arg0: i32) -> (i32, i32) {
    %c0_i32 = arith.constant 0 : i32
    %c0_i32_0 = arith.constant 0 : i32
    %c0_i32_1 = arith.constant 0 : i32
    return %c0_i32, %c0_i32_0 : i32, i32
  }
  func.func @transform_5(%arg0: i32) -> (i32, i32) {
    %c0_i32 = arith.constant 0 : i32
    %c0_i32_0 = arith.constant 0 : i32
    %c0_i32_1 = arith.constant 0 : i32
    return %c0_i32, %c0_i32_0 : i32, i32
  }
  func.func @transform_6(%arg0: i32) -> (i32, i32) {
    %c0_i32 = arith.constant 0 : i32
    %c0_i32_0 = arith.constant 0 : i32
    %c0_i32_1 = arith.constant 0 : i32
    return %c0_i32, %c0_i32_0 : i32, i32
  }
  func.func @transform_7(%arg0: i32) -> (i32, i32) {
    %c0_i32 = arith.constant 0 : i32
    %c0_i32_0 = arith.constant 0 : i32
    %c0_i32_1 = arith.constant 0 : i32
    return %c0_i32, %c0_i32_0 : i32, i32
  }
  func.func @transform_8(%arg0: i32) -> (i32, i32) {
    %c0_i32 = arith.constant 0 : i32
    %c0_i32_0 = arith.constant 0 : i32
    %c0_i32_1 = arith.constant 0 : i32
    return %c0_i32, %c0_i32_0 : i32, i32
  }
  func.func @transform_9(%arg0: i32) -> (i32, i32) {
    %c0_i32 = arith.constant 0 : i32
    %c0_i32_0 = arith.constant 0 : i32
    return %arg0, %c0_i32 : i32, i32
  }
}

</mosaic_0001>

<llo_original>
// kernel: tpu_custom_call.1
$region0: #{tpu_custom_call.1}
  #allocation0 [shape = 'u32[]', space=smem, size = 0x4, offset = 0x4, fixed_abs, tag = 'smem constant byte address 0x4 - core index']
  #allocation1 [shape = 'u32[144,128]{1,0:T(1,128)}', space=vmem, size = 0x12000, scoped, tag = 'internal scratch']
  #allocation2 [shape = 'f32[1,1]{1,0:T(1,128)S(1)}', space=vmem, size = 0x200, scoped, tag = 'scoped memory for tpu_custom_call.1']
  %s0 = inlined_call_operand.vmem [shape: f32[1024,32], index: 0, kind: input, shape index: {}]
  %s1 = inlined_call_operand.vmem [shape: bf16[32,128], index: 1, kind: input, shape index: {}]
  %s2 = inlined_call_operand.vmem [shape: f32[1,128], index: 2, kind: input, shape index: {}]
  %s3 = inlined_call_operand.vmem [shape: bf16[128,64], index: 3, kind: input, shape index: {}]
  %s4 = inlined_call_operand.vmem [shape: f32[1,64], index: 4, kind: input, shape index: {}]
  %s5 = inlined_call_operand.vmem [shape: bf16[64,32], index: 5, kind: input, shape index: {}]
  %s6 = inlined_call_operand.vmem [shape: f32[1,32], index: 6, kind: input, shape index: {}]
  %s7 = inlined_call_operand.vmem [shape: bf16[1,32], index: 7, kind: input, shape index: {}]
  %s8 = inlined_call_operand.<no memory space> [shape: f32[1,1], index: 8, kind: input, shape index: {}]
  %s9 = inlined_call_operand.vmem [shape: f32[1024,1], index: 9, kind: output, shape index: {}]
  %s10 = sld [smem:[#allocation0]]
  $region69: #{tpu_custom_call.1} parent=0
    _
  %s12 = ssub.s32 1, %s10
  %s13 = scalar_select 0, %s12, %s10
  %v14 = vstv %s8
  %15 = vst [vmem:[#allocation2] sm:$0x1] %v14
  loop: start=0, step=1, limit=6
  $region2: #{tpu_custom_call.1} parent=0 // loop_pre_header
    _
  $region3: #{tpu_custom_call.1} parent=0 // loop_header
    %s17 = sphi 0, %s21
    %p18 = scmp.ge.s32.totalorder %s17, 6
    %s27 = sphi 0, %s29
    %s30 = sphi 0, %s27
    %s31 = sphi 0, %s30
    %s47 = sphi 0, %s31
    %s51 = sphi 0, %s51
    %s53 = sphi 0, %s51
    %s54 = sphi 0, %s53
    %s68 = sphi 0, %s54
    %s72 = sphi 0, %s72
    %s74 = sphi 0, %s72
    %s75 = sphi 0, %s74
    %s89 = sphi 0, %s75
    %s93 = sphi 0, %s93
    %s95 = sphi 0, %s93
    %s96 = sphi 0, %s95
    %s110 = sphi 0, %s96
    %s114 = sphi 0, %s114
    %s116 = sphi 0, %s114
    %s117 = sphi 0, %s116
    %s131 = sphi 0, %s117
    %s135 = sphi 0, %s135
    %s137 = sphi 0, %s135
    %s138 = sphi 0, %s137
    %s152 = sphi 0, %s138
    %s156 = sphi 0, %s156
    %s158 = sphi 0, %s156
    %s159 = sphi 0, %s158
    %s173 = sphi 0, %s159
    %s177 = sphi 0, %s177
    %s179 = sphi 0, %s177
    %s180 = sphi 0, %s179
    %s194 = sphi 0, %s180
    %s198 = sphi 0, %s198
    %s200 = sphi 0, %s198
    %s201 = sphi 0, %s200
    %s215 = sphi 0, %s201
    %s221 = sphi 0, %s223
    %s224 = sphi 0, %s221
    %s225 = sphi 0, %s224
    %s241 = sphi 0, %s225
  $region4: #{tpu_custom_call.1} parent=0 // loop_header_branch
    %20 = sbr.rel (%p18) target = $region8
  $region5: #{tpu_custom_call.1} parent=0 // loop_body
    %s22 = ssub.s32 %s17, 1
    %s23 = ssub.s32 %s17, 2
    %s24 = sadd.s32 %s17, 1
    %s25 = ssub.s32 %s17, %s24
    %p26 = scmp.eq.s32.totalorder %s25, 0
    %s28 = sadd.s32 %s27, 1
    %s29 = scalar_select %p26, %s27, %s28
    %p32 = pneg %p26
    %p33 = scmp.eq.s32.totalorder %s17, 3
    %p34 = por %p32, %p33
    %p35 = scmp.ne.s32.totalorder %s27, %s30
    %p36 = scmp.eq.s32.totalorder %s17, 0
    %p37 = por %p35, %p36
    %p38 = scmp.ne.s32.totalorder %s27, %s30
    %p39 = scmp.eq.s32.totalorder %s22, 3
    %p40 = por %p38, %p39
    %p41 = scmp.ne.s32.totalorder %s30, %s31
    %p42 = scmp.eq.s32.totalorder %s22, 0
    %p43 = por %p41, %p42
    %p44 = scmp.ne.s32.totalorder %s30, %s31
    %p45 = scmp.eq.s32.totalorder %s23, 3
    %p46 = por %p44, %p45
    %p48 = scmp.ne.s32.totalorder %s31, %s47
    %p49 = scmp.eq.s32.totalorder %s23, 0
    %p50 = por %p48, %p49
    %s52 = sadd.s32 %s51, 1
    %p55 = scmp.eq.s32.totalorder %s17, 3
    %p56 = scmp.ne.s32.totalorder %s51, %s53
    %p57 = scmp.eq.s32.totalorder %s17, 0
    %p58 = por %p56, %p57
    %p59 = scmp.ne.s32.totalorder %s51, %s53
    %p60 = scmp.eq.s32.totalorder %s22, 3
    %p61 = por %p59, %p60
    %p62 = scmp.ne.s32.totalorder %s53, %s54
    %p63 = scmp.eq.s32.totalorder %s22, 0
    %p64 = por %p62, %p63
    %p65 = scmp.ne.s32.totalorder %s53, %s54
    %p66 = scmp.eq.s32.totalorder %s23, 3
    %p67 = por %p65, %p66
    %p69 = scmp.ne.s32.totalorder %s54, %s68
    %p70 = scmp.eq.s32.totalorder %s23, 0
    %p71 = por %p69, %p70
    %s73 = sadd.s32 %s72, 1
    %p76 = scmp.eq.s32.totalorder %s17, 3
    %p77 = scmp.ne.s32.totalorder %s72, %s74
    %p78 = scmp.eq.s32.totalorder %s17, 0
    %p79 = por %p77, %p78
    %p80 = scmp.ne.s32.totalorder %s72, %s74
    %p81 = scmp.eq.s32.totalorder %s22, 3
    %p82 = por %p80, %p81
    %p83 = scmp.ne.s32.totalorder %s74, %s75
    %p84 = scmp.eq.s32.totalorder %s22, 0
    %p85 = por %p83, %p84
    %p86 = scmp.ne.s32.totalorder %s74, %s75
    %p87 = scmp.eq.s32.totalorder %s23, 3
    %p88 = por %p86, %p87
    %p90 = scmp.ne.s32.totalorder %s75, %s89
    %p91 = scmp.eq.s32.totalorder %s23, 0
    %p92 = por %p90, %p91
    %s94 = sadd.s32 %s93, 1
    %p97 = scmp.eq.s32.totalorder %s17, 3
    %p98 = scmp.ne.s32.totalorder %s93, %s95
    %p99 = scmp.eq.s32.totalorder %s17, 0
    %p100 = por %p98, %p99
    %p101 = scmp.ne.s32.totalorder %s93, %s95
    %p102 = scmp.eq.s32.totalorder %s22, 3
    %p103 = por %p101, %p102
    %p104 = scmp.ne.s32.totalorder %s95, %s96
    %p105 = scmp.eq.s32.totalorder %s22, 0
    %p106 = por %p104, %p105
    %p107 = scmp.ne.s32.totalorder %s95, %s96
    %p108 = scmp.eq.s32.totalorder %s23, 3
    %p109 = por %p107, %p108
    %p111 = scmp.ne.s32.totalorder %s96, %s110
    %p112 = scmp.eq.s32.totalorder %s23, 0
    %p113 = por %p111, %p112
    %s115 = sadd.s32 %s114, 1
    %p118 = scmp.eq.s32.totalorder %s17, 3
    %p119 = scmp.ne.s32.totalorder %s114, %s116
    %p120 = scmp.eq.s32.totalorder %s17, 0
    %p121 = por %p119, %p120
    %p122 = scmp.ne.s32.totalorder %s114, %s116
    %p123 = scmp.eq.s32.totalorder %s22, 3
    %p124 = por %p122, %p123
    %p125 = scmp.ne.s32.totalorder %s116, %s117
    %p126 = scmp.eq.s32.totalorder %s22, 0
    %p127 = por %p125, %p126
    %p128 = scmp.ne.s32.totalorder %s116, %s117
    %p129 = scmp.eq.s32.totalorder %s23, 3
    %p130 = por %p128, %p129
    %p132 = scmp.ne.s32.totalorder %s117, %s131
    %p133 = scmp.eq.s32.totalorder %s23, 0
    %p134 = por %p132, %p133
    %s136 = sadd.s32 %s135, 1
    %p139 = scmp.eq.s32.totalorder %s17, 3
    %p140 = scmp.ne.s32.totalorder %s135, %s137
    %p141 = scmp.eq.s32.totalorder %s17, 0
    %p142 = por %p140, %p141
    %p143 = scmp.ne.s32.totalorder %s135, %s137
    %p144 = scmp.eq.s32.totalorder %s22, 3
    %p145 = por %p143, %p144
    %p146 = scmp.ne.s32.totalorder %s137, %s138
    %p147 = scmp.eq.s32.totalorder %s22, 0
    %p148 = por %p146, %p147
    %p149 = scmp.ne.s32.totalorder %s137, %s138
    %p150 = scmp.eq.s32.totalorder %s23, 3
    %p151 = por %p149, %p150
    %p153 = scmp.ne.s32.totalorder %s138, %s152
    %p154 = scmp.eq.s32.totalorder %s23, 0
    %p155 = por %p153, %p154
    %s157 = sadd.s32 %s156, 1
    %p160 = scmp.eq.s32.totalorder %s17, 3
    %p161 = scmp.ne.s32.totalorder %s156, %s158
    %p162 = scmp.eq.s32.totalorder %s17, 0
    %p163 = por %p161, %p162
    %p164 = scmp.ne.s32.totalorder %s156, %s158
    %p165 = scmp.eq.s32.totalorder %s22, 3
    %p166 = por %p164, %p165
    %p167 = scmp.ne.s32.totalorder %s158, %s159
    %p168 = scmp.eq.s32.totalorder %s22, 0
    %p169 = por %p167, %p168
    %p170 = scmp.ne.s32.totalorder %s158, %s159
    %p171 = scmp.eq.s32.totalorder %s23, 3
    %p172 = por %p170, %p171
    %p174 = scmp.ne.s32.totalorder %s159, %s173
    %p175 = scmp.eq.s32.totalorder %s23, 0
    %p176 = por %p174, %p175
    %s178 = sadd.s32 %s177, 1
    %p181 = scmp.eq.s32.totalorder %s17, 3
    %p182 = scmp.ne.s32.totalorder %s177, %s179
    %p183 = scmp.eq.s32.totalorder %s17, 0
    %p184 = por %p182, %p183
    %p185 = scmp.ne.s32.totalorder %s177, %s179
    %p186 = scmp.eq.s32.totalorder %s22, 3
    %p187 = por %p185, %p186
    %p188 = scmp.ne.s32.totalorder %s179, %s180
    %p189 = scmp.eq.s32.totalorder %s22, 0
    %p190 = por %p188, %p189
    %p191 = scmp.ne.s32.totalorder %s179, %s180
    %p192 = scmp.eq.s32.totalorder %s23, 3
    %p193 = por %p191, %p192
    %p195 = scmp.ne.s32.totalorder %s180, %s194
    %p196 = scmp.eq.s32.totalorder %s23, 0
    %p197 = por %p195, %p196
    %s199 = sadd.s32 %s198, 1
    %p202 = scmp.eq.s32.totalorder %s17, 3
    %p203 = scmp.ne.s32.totalorder %s198, %s200
    %p204 = scmp.eq.s32.totalorder %s17, 0
    %p205 = por %p203, %p204
    %p206 = scmp.ne.s32.totalorder %s198, %s200
    %p207 = scmp.eq.s32.totalorder %s22, 3
    %p208 = por %p206, %p207
    %p209 = scmp.ne.s32.totalorder %s200, %s201
    %p210 = scmp.eq.s32.totalorder %s22, 0
    %p211 = por %p209, %p210
    %p212 = scmp.ne.s32.totalorder %s200, %s201
    %p213 = scmp.eq.s32.totalorder %s23, 3
    %p214 = por %p212, %p213
    %p216 = scmp.ne.s32.totalorder %s201, %s215
    %p217 = scmp.eq.s32.totalorder %s23, 0
    %p218 = por %p216, %p217
    %s219 = ssub.s32 %s17, %s24
    %p220 = scmp.eq.s32.totalorder %s219, 0
    %s222 = sadd.s32 %s221, 1
    %s223 = scalar_select %p220, %s221, %s222
    %p226 = pneg %p220
    %p227 = scmp.eq.s32.totalorder %s17, 3
    %p228 = por %p226, %p227
    %p229 = scmp.ne.s32.totalorder %s221, %s224
    %p230 = scmp.eq.s32.totalorder %s17, 0
    %p231 = por %p229, %p230
    %p232 = scmp.ne.s32.totalorder %s221, %s224
    %p233 = scmp.eq.s32.totalorder %s22, 3
    %p234 = por %p232, %p233
    %p235 = scmp.ne.s32.totalorder %s224, %s225
    %p236 = scmp.eq.s32.totalorder %s22, 0
    %p237 = por %p235, %p236
    %p238 = scmp.ne.s32.totalorder %s224, %s225
    %p239 = scmp.eq.s32.totalorder %s23, 3
    %p240 = por %p238, %p239
    %p242 = scmp.ne.s32.totalorder %s225, %s241
    %p243 = scmp.eq.s32.totalorder %s23, 0
    %p244 = por %p242, %p243
    %p245 = scmp.le.s32.totalorder 1, %s17
    %p246 = scmp.lt.s32.totalorder %s17, 5
    %p247 = pnand %p245, %p246
    %p248 = pneg %p247
    // Predicated region
    $region9: #{tpu_custom_call.1} parent=5 // pred_check
      _
    $region10: #{tpu_custom_call.1} parent=5 // pred_check_branch
      %250 = sbr.rel (%p247) target = $region12
    $region11: #{tpu_custom_call.1} parent=5 // pred_region
      %s251 = ssub.s32 %s17, 1
      // Predicated region
      $region13: #{tpu_custom_call.1} parent=11 // pred_check
        %p252 = pneg %p64
      $region14: #{tpu_custom_call.1} parent=11 // pred_check_branch
        %254 = sbr.rel (%p252) target = $region16
      $region15: #{tpu_custom_call.1} parent=11 // pred_region
        _
      $region16: #{tpu_custom_call.1} parent=11 // pred_fallthru
        _
      // Predicated region
      $region17: #{tpu_custom_call.1} parent=11 // pred_check
        %p255 = pneg %p85
      $region18: #{tpu_custom_call.1} parent=11 // pred_check_branch
        %257 = sbr.rel (%p255) target = $region20
      $region19: #{tpu_custom_call.1} parent=11 // pred_region
        _
      $region20: #{tpu_custom_call.1} parent=11 // pred_fallthru
        _
      // Predicated region
      $region21: #{tpu_custom_call.1} parent=11 // pred_check
        %p258 = pneg %p106
      $region22: #{tpu_custom_call.1} parent=11 // pred_check_branch
        %260 = sbr.rel (%p258) target = $region24
      $region23: #{tpu_custom_call.1} parent=11 // pred_region
        _
      $region24: #{tpu_custom_call.1} parent=11 // pred_fallthru
        _
      // Predicated region
      $region25: #{tpu_custom_call.1} parent=11 // pred_check
        %p261 = pneg %p127
      $region26: #{tpu_custom_call.1} parent=11 // pred_check_branch
        %263 = sbr.rel (%p261) target = $region28
      $region27: #{tpu_custom_call.1} parent=11 // pred_region
        _
      $region28: #{tpu_custom_call.1} parent=11 // pred_fallthru
        _
      // Predicated region
      $region29: #{tpu_custom_call.1} parent=11 // pred_check
        %p264 = pneg %p148
      $region30: #{tpu_custom_call.1} parent=11 // pred_check_branch
        %266 = sbr.rel (%p264) target = $region32
      $region31: #{tpu_custom_call.1} parent=11 // pred_region
        _
      $region32: #{tpu_custom_call.1} parent=11 // pred_fallthru
        _
      // Predicated region
      $region33: #{tpu_custom_call.1} parent=11 // pred_check
        %p267 = pneg %p169
      $region34: #{tpu_custom_call.1} parent=11 // pred_check_branch
        %269 = sbr.rel (%p267) target = $region36
      $region35: #{tpu_custom_call.1} parent=11 // pred_region
        _
      $region36: #{tpu_custom_call.1} parent=11 // pred_fallthru
        _
      // Predicated region
      $region37: #{tpu_custom_call.1} parent=11 // pred_check
        %p270 = pneg %p190
      $region38: #{tpu_custom_call.1} parent=11 // pred_check_branch
        %272 = sbr.rel (%p270) target = $region40
      $region39: #{tpu_custom_call.1} parent=11 // pred_region
        _
      $region40: #{tpu_custom_call.1} parent=11 // pred_fallthru
        _
      // Predicated region
      $region41: #{tpu_custom_call.1} parent=11 // pred_check
        %p273 = pneg %p211
      $region42: #{tpu_custom_call.1} parent=11 // pred_check_branch
        %275 = sbr.rel (%p273) target = $region44
      $region43: #{tpu_custom_call.1} parent=11 // pred_region
        _
      $region44: #{tpu_custom_call.1} parent=11 // pred_fallthru
        _
    $region12: #{tpu_custom_call.1} parent=5 // pred_fallthru
      _
    %p276 = scmp.lt.s32.totalorder %s17, 4
    // Predicated region
    $region45: #{tpu_custom_call.1} parent=5 // pred_check
      %p277 = pneg %p276
    $region46: #{tpu_custom_call.1} parent=5 // pred_check_branch
      %279 = sbr.rel (%p277) target = $region48
    $region47: #{tpu_custom_call.1} parent=5 // pred_region
      // Predicated region
      $region49: #{tpu_custom_call.1} parent=47 // pred_check
        %p280 = pneg %p37
      $region50: #{tpu_custom_call.1} parent=47 // pred_check_branch
        %282 = sbr.rel (%p280) target = $region52
      $region51: #{tpu_custom_call.1} parent=47 // pred_region
        %s283 = smul.u32 32, %s17
        %p284 = scmp.lt.s32.totalorder %s283, 127
        %s285 = scalar_select %p284, %s283, 127
        %s286 = smul.addr %s285, 8
        %s287 = scalar_lea.vmem %s0, %s286
        %s288 = smul.u32 32, %s17
      $region52: #{tpu_custom_call.1} parent=47 // pred_fallthru
        _
    $region48: #{tpu_custom_call.1} parent=5 // pred_fallthru
      _
    %p289 = scmp.le.s32.totalorder 1, %s17
    %p290 = scmp.lt.s32.totalorder %s17, 5
    %p291 = pnand %p289, %p290
    %p292 = pneg %p291
    // Predicated region
    $region53: #{tpu_custom_call.1} parent=5 // pred_check
      _
    $region54: #{tpu_custom_call.1} parent=5 // pred_check_branch
      %294 = sbr.rel (%p291) target = $region56
    $region55: #{tpu_custom_call.1} parent=5 // pred_region
      %s295 = ssub.s32 %s17, 1
      %s296 = smul.u32 32, %s22
      %p297 = scmp.lt.s32.totalorder %s296, 127
      %s298 = scalar_select %p297, %s296, 127
      %s299 = smul.addr %s298, 8
      %s300 = scalar_lea.vmem %s0, %s299
      %p301 = pneg %p43
      %p302 = pneg %p40
      %p303 = pneg %p64
      %p304 = pneg %p61
      %p305 = pneg %p85
      %p306 = pneg %p82
      %p307 = pneg %p106
      %p308 = pneg %p103
      %p309 = pneg %p127
      %p310 = pneg %p124
      %p311 = pneg %p148
      %p312 = pneg %p145
      %p313 = pneg %p169
      %p314 = pneg %p166
      %p315 = pneg %p190
      %p316 = pneg %p187
      %p317 = pneg %p211
      %p318 = pneg %p208
      %p319 = pneg %p237
      %p320 = pneg %p234
      %s321 = smul.u32 32, %s22
      %p322 = scmp.lt.s32.totalorder %s321, 127
      %s323 = scalar_select %p322, %s321, 127
      %s324 = smul.addr %s323, 8
      %s325 = scalar_lea.vmem %s9, %s324
      %s326 = smul.u32 32, %s22
      %p327 = scmp.lt.s32.totalorder %s326, 127
      %s328 = scalar_select %p327, %s326, 127
      %s329 = smul.addr %s328, 8
      %s330 = scalar_lea.vmem %s0, %s329
      %s331 = smul.u32 32, %s22
      %s332 = smul.u32 32, %s22
      %p333 = scmp.lt.s32.totalorder %s332, 127
      %s334 = scalar_select %p333, %s332, 127
      %s335 = smul.addr %s334, 8
      %s336 = scalar_lea.vmem %s9, %s335
      %s337 = smul.u32 32, %s22
      %v339 = vld [vmem:[%s330] sm:$0xff]
      %v340 = vld [vmem:[%s330 + $0x8] sm:$0xff]
      %v341 = vld [vmem:[%s330 + $0x10] sm:$0xff]
      %v342 = vld [vmem:[%s330 + $0x18] sm:$0xff]
      %v343 = vld [vmem:[%s330 + $0x20] sm:$0xff]
      %v344 = vld [vmem:[%s330 + $0x28] sm:$0xff]
      %v345 = vld [vmem:[%s330 + $0x30] sm:$0xff]
      %v346 = vld [vmem:[%s330 + $0x38] sm:$0xff]
      %v347 = vld [vmem:[%s330 + $0x40] sm:$0xff]
      %v348 = vld [vmem:[%s330 + $0x48] sm:$0xff]
      %v349 = vld [vmem:[%s330 + $0x50] sm:$0xff]
      %v350 = vld [vmem:[%s330 + $0x58] sm:$0xff]
      %v351 = vld [vmem:[%s330 + $0x60] sm:$0xff]
      %v352 = vld [vmem:[%s330 + $0x68] sm:$0xff]
      %v353 = vld [vmem:[%s330 + $0x70] sm:$0xff]
      %v354 = vld [vmem:[%s330 + $0x78] sm:$0xff]
      %v355 = vld [vmem:[%s330 + $0x80] sm:$0xff]
      %v356 = vld [vmem:[%s330 + $0x88] sm:$0xff]
      %v357 = vld [vmem:[%s330 + $0x90] sm:$0xff]
      %v358 = vld [vmem:[%s330 + $0x98] sm:$0xff]
      %v359 = vld [vmem:[%s330 + $0xa0] sm:$0xff]
      %v360 = vld [vmem:[%s330 + $0xa8] sm:$0xff]
      %v361 = vld [vmem:[%s330 + $0xb0] sm:$0xff]
      %v362 = vld [vmem:[%s330 + $0xb8] sm:$0xff]
      %v363 = vld [vmem:[%s330 + $0xc0] sm:$0xff]
      %v364 = vld [vmem:[%s330 + $0xc8] sm:$0xff]
      %v365 = vld [vmem:[%s330 + $0xd0] sm:$0xff]
      %v366 = vld [vmem:[%s330 + $0xd8] sm:$0xff]
      %v367 = vld [vmem:[%s330 + $0xe0] sm:$0xff]
      %v368 = vld [vmem:[%s330 + $0xe8] sm:$0xff]
      %v369 = vld [vmem:[%s330 + $0xf0] sm:$0xff]
      %v370 = vld [vmem:[%s330 + $0xf8] sm:$0xff]
      %v371 = vpack.c.bf16 %v340, %v339
      %v372 = vpack.c.bf16 %v342, %v341
      %v373 = vpack.c.bf16 %v344, %v343
      %v374 = vpack.c.bf16 %v346, %v345
      %v375 = vpack.c.bf16 %v348, %v347
      %v376 = vpack.c.bf16 %v350, %v349
      %v377 = vpack.c.bf16 %v352, %v351
      %v378 = vpack.c.bf16 %v354, %v353
      %v379 = vpack.c.bf16 %v356, %v355
      %v380 = vpack.c.bf16 %v358, %v357
      %v381 = vpack.c.bf16 %v360, %v359
      %v382 = vpack.c.bf16 %v362, %v361
      %v383 = vpack.c.bf16 %v364, %v363
      %v384 = vpack.c.bf16 %v366, %v365
      %v385 = vpack.c.bf16 %v368, %v367
      %v386 = vpack.c.bf16 %v370, %v369
      %v387 = vld [vmem:[%s1] sm:$0xf]
      %v388 = vld [vmem:[%s1 + $0x4] sm:$0xf]
      %v389 = vld [vmem:[%s1 + $0x8] sm:$0xf]
      %v390 = vld [vmem:[%s1 + $0xc] sm:$0xf]
      %v391 = vld [vmem:[%s2] sm:$0x1]
      %v393 = vlaneseq
      %v394 = vshrl.u32 %v393, 7
      %v395 = vsub.s32 0, %v394
      %v396 = vrot.slane %v391, %v395
      %v402 = vunpack.c.l.b16 %v387
      %v403 = vunpack.c.l.b16 %v388
      %v404 = vunpack.c.l.b16 %v389
      %v405 = vunpack.c.l.b16 %v390
      %v406 = vpack.c.b16 %v403, %v402
      %v407 = vpack.c.b16 %v405, %v404
      %vm410 = vcmask 261120
      %v412 = vsel %vm410, %v371, 0
      %v415 = vsel %vm410, %v372, 0
      %v418 = vsel %vm410, %v373, 0
      %v421 = vsel %vm410, %v374, 0
      %v424 = vsel %vm410, %v375, 0
      %v427 = vsel %vm410, %v376, 0
      %v430 = vsel %vm410, %v377, 0
      %v433 = vsel %vm410, %v378, 0
      %v436 = vsel %vm410, %v379, 0
      %v439 = vsel %vm410, %v380, 0
      %v442 = vsel %vm410, %v381, 0
      %v445 = vsel %vm410, %v382, 0
      %v448 = vsel %vm410, %v383, 0
      %v451 = vsel %vm410, %v384, 0
      %v454 = vsel %vm410, %v385, 0
      %v457 = vsel %vm410, %v386, 0
      %459 = vmatprep.subr.bf16.mxu0 0
      %460 = vmatpush1.bf16.msra.mxu0 %v406
      %461 = vmatprep.subr.bf16.mxu0 0
      %462 = vmatpush1.bf16.msra.mxu0 %v407
      %463 = vmatprep.subr.bf16.mxu0 0
      %464 = vmatpush1.bf16.msra.mxu0 0
      %465 = vmatprep.subr.bf16.mxu0 0
      %466 = vmatpush1.bf16.msra.mxu0 0
      %467 = vmatprep.subr.bf16.mxu0 0
      %468 = vmatpush1.bf16.msra.mxu0 0
      %469 = vmatprep.subr.bf16.mxu0 0
      %470 = vmatpush1.bf16.msra.mxu0 0
      %471 = vmatprep.subr.bf16.mxu0 0
      %472 = vmatpush1.bf16.msra.mxu0 0
      %473 = vmatprep.subr.bf16.mxu0 0
      %474 = vmatpush1.bf16.msra.mxu0 0
      %475 = vmatprep.subr.bf16.mxu0 0
      %476 = vmatpush1.bf16.msra.mxu0 0
      %477 = vmatprep.subr.bf16.mxu0 0
      %478 = vmatpush1.bf16.msra.mxu0 0
      %479 = vmatprep.subr.bf16.mxu0 0
      %480 = vmatpush1.bf16.msra.mxu0 0
      %481 = vmatprep.subr.bf16.mxu0 0
      %482 = vmatpush1.bf16.msra.mxu0 0
      %483 = vmatprep.subr.bf16.mxu0 0
      %484 = vmatpush1.bf16.msra.mxu0 0
      %485 = vmatprep.subr.bf16.mxu0 0
      %486 = vmatpush1.bf16.msra.mxu0 0
      %487 = vmatprep.subr.bf16.mxu0 0
      %488 = vmatpush1.bf16.msra.mxu0 0
      %489 = vmatprep.subr.bf16.mxu0 0
      %490 = vmatpush1.bf16.msra.mxu0 0
      %491 = vmatprep.mubr.bf16.mxu0 0
      %492 = vmatmul.mubr.bf16.gmra.mrb[0].mxu0 %v412
      %v493 = vpop.f32.mrb[0].mxu0
      %v494 = vadd.f32 %v396, %v493
      %v495 = vpop.f32.mrb[0].mxu0
      %v496 = vpop.f32.mrb[0].mxu0
      %v497 = vadd.f32 %v396, %v496
      %v498 = vpop.f32.mrb[0].mxu0
      %499 = vmatprep.mubr.bf16.mxu0 0
      %500 = vmatmul.mubr.bf16.gmra.mrb[0].mxu0 %v415
      %v501 = vpop.f32.mrb[0].mxu0
      %v502 = vadd.f32 %v396, %v501
      %v503 = vpop.f32.mrb[0].mxu0
      %v504 = vpop.f32.mrb[0].mxu0
      %v505 = vadd.f32 %v396, %v504
      %v506 = vpop.f32.mrb[0].mxu0
      %507 = vmatprep.mubr.bf16.mxu0 0
      %508 = vmatmul.mubr.bf16.gmra.mrb[0].mxu0 %v418
      %v509 = vpop.f32.mrb[0].mxu0
      %v510 = vadd.f32 %v396, %v509
      %v511 = vpop.f32.mrb[0].mxu0
      %v512 = vpop.f32.mrb[0].mxu0
      %v513 = vadd.f32 %v396, %v512
      %v514 = vpop.f32.mrb[0].mxu0
      %515 = vmatprep.mubr.bf16.mxu0 0
      %516 = vmatmul.mubr.bf16.gmra.mrb[0].mxu0 %v421
      %v517 = vpop.f32.mrb[0].mxu0
      %v518 = vadd.f32 %v396, %v517
      %v519 = vpop.f32.mrb[0].mxu0
      %v520 = vpop.f32.mrb[0].mxu0
      %v521 = vadd.f32 %v396, %v520
      %v522 = vpop.f32.mrb[0].mxu0
      %523 = vmatprep.mubr.bf16.mxu0 0
      %524 = vmatmul.mubr.bf16.gmra.mrb[0].mxu0 %v424
      %v525 = vpop.f32.mrb[0].mxu0
      %v526 = vadd.f32 %v396, %v525
      %v527 = vpop.f32.mrb[0].mxu0
      %v528 = vpop.f32.mrb[0].mxu0
      %v529 = vadd.f32 %v396, %v528
      %v530 = vpop.f32.mrb[0].mxu0
      %531 = vmatprep.mubr.bf16.mxu0 0
      %532 = vmatmul.mubr.bf16.gmra.mrb[0].mxu0 %v427
      %v533 = vpop.f32.mrb[0].mxu0
      %v534 = vadd.f32 %v396, %v533
      %v535 = vpop.f32.mrb[0].mxu0
      %v536 = vpop.f32.mrb[0].mxu0
      %v537 = vadd.f32 %v396, %v536
      %v538 = vpop.f32.mrb[0].mxu0
      %539 = vmatprep.mubr.bf16.mxu0 0
      %540 = vmatmul.mubr.bf16.gmra.mrb[0].mxu0 %v430
      %v541 = vpop.f32.mrb[0].mxu0
      %v542 = vadd.f32 %v396, %v541
      %v543 = vpop.f32.mrb[0].mxu0
      %v544 = vpop.f32.mrb[0].mxu0
      %v545 = vadd.f32 %v396, %v544
      %v546 = vpop.f32.mrb[0].mxu0
      %547 = vmatprep.mubr.bf16.mxu0 0
      %548 = vmatmul.mubr.bf16.gmra.mrb[0].mxu0 %v433
      %v549 = vpop.f32.mrb[0].mxu0
      %v550 = vadd.f32 %v396, %v549
      %v551 = vpop.f32.mrb[0].mxu0
      %v552 = vpop.f32.mrb[0].mxu0
      %v553 = vadd.f32 %v396, %v552
      %v554 = vpop.f32.mrb[0].mxu0
      %555 = vmatprep.mubr.bf16.mxu0 0
      %556 = vmatmul.mubr.bf16.gmra.mrb[0].mxu0 %v436
      %v557 = vpop.f32.mrb[0].mxu0
      %v558 = vadd.f32 %v396, %v557
      %v559 = vpop.f32.mrb[0].mxu0
      %v560 = vpop.f32.mrb[0].mxu0
      %v561 = vadd.f32 %v396, %v560
      %v562 = vpop.f32.mrb[0].mxu0
      %563 = vmatprep.mubr.bf16.mxu0 0
      %564 = vmatmul.mubr.bf16.gmra.mrb[0].mxu0 %v439
      %v565 = vpop.f32.mrb[0].mxu0
      %v566 = vadd.f32 %v396, %v565
      %v567 = vpop.f32.mrb[0].mxu0
      %v568 = vpop.f32.mrb[0].mxu0
      %v569 = vadd.f32 %v396, %v568
      %v570 = vpop.f32.mrb[0].mxu0
      %571 = vmatprep.mubr.bf16.mxu0 0
      %572 = vmatmul.mubr.bf16.gmra.mrb[0].mxu0 %v442
      %v573 = vpop.f32.mrb[0].mxu0
      %v574 = vadd.f32 %v396, %v573
      %v575 = vpop.f32.mrb[0].mxu0
      %v576 = vpop.f32.mrb[0].mxu0
      %v577 = vadd.f32 %v396, %v576
      %v578 = vpop.f32.mrb[0].mxu0
      %579 = vmatprep.mubr.bf16.mxu0 0
      %580 = vmatmul.mubr.bf16.gmra.mrb[0].mxu0 %v445
      %v581 = vpop.f32.mrb[0].mxu0
      %v582 = vadd.f32 %v396, %v581
      %v583 = vpop.f32.mrb[0].mxu0
      %v584 = vpop.f32.mrb[0].mxu0
      %v585 = vadd.f32 %v396, %v584
      %v586 = vpop.f32.mrb[0].mxu0
      %587 = vmatprep.mubr.bf16.mxu0 0
      %588 = vmatmul.mubr.bf16.gmra.mrb[0].mxu0 %v448
      %v589 = vpop.f32.mrb[0].mxu0
      %v590 = vadd.f32 %v396, %v589
      %v591 = vpop.f32.mrb[0].mxu0
      %v592 = vpop.f32.mrb[0].mxu0
      %v593 = vadd.f32 %v396, %v592
      %v594 = vpop.f32.mrb[0].mxu0
      %595 = vmatprep.mubr.bf16.mxu0 0
      %596 = vmatmul.mubr.bf16.gmra.mrb[0].mxu0 %v451
      %v597 = vpop.f32.mrb[0].mxu0
      %v598 = vadd.f32 %v396, %v597
      %v599 = vpop.f32.mrb[0].mxu0
      %v600 = vpop.f32.mrb[0].mxu0
      %v601 = vadd.f32 %v396, %v600
      %v602 = vpop.f32.mrb[0].mxu0
      %603 = vmatprep.mubr.bf16.mxu0 0
      %604 = vmatmul.mubr.bf16.gmra.mrb[0].mxu0 %v454
      %v605 = vpop.f32.mrb[0].mxu0
      %v606 = vadd.f32 %v396, %v605
      %v607 = vpop.f32.mrb[0].mxu0
      %v608 = vpop.f32.mrb[0].mxu0
      %v609 = vadd.f32 %v396, %v608
      %v610 = vpop.f32.mrb[0].mxu0
      %611 = vmatprep.mubr.bf16.mxu0 0
      %612 = vmatmul.mubr.bf16.gmra.mrb[0].mxu0 %v457
      %v613 = vpop.f32.mrb[0].mxu0
      %v614 = vadd.f32 %v396, %v613
      %v615 = vpop.f32.mrb[0].mxu0
      %v616 = vpop.f32.mrb[0].mxu0
      %v617 = vadd.f32 %v396, %v616
      %v618 = vpop.f32.mrb[0].mxu0
      %619 = vdwg.mxu0
      %v620 = vmax.f32 %v494, 0.0
      %v621 = vmax.f32 %v497, 0.0
      %v622 = vmax.f32 %v502, 0.0
      %v623 = vmax.f32 %v505, 0.0
      %v624 = vmax.f32 %v510, 0.0
      %v625 = vmax.f32 %v513, 0.0
      %v626 = vmax.f32 %v518, 0.0
      %v627 = vmax.f32 %v521, 0.0
      %v628 = vmax.f32 %v526, 0.0
      %v629 = vmax.f32 %v529, 0.0
      %v630 = vmax.f32 %v534, 0.0
      %v631 = vmax.f32 %v537, 0.0
      %v632 = vmax.f32 %v542, 0.0
      %v633 = vmax.f32 %v545, 0.0
      %v634 = vmax.f32 %v550, 0.0
      %v635 = vmax.f32 %v553, 0.0
      %v636 = vmax.f32 %v558, 0.0
      %v637 = vmax.f32 %v561, 0.0
      %v638 = vmax.f32 %v566, 0.0
      %v639 = vmax.f32 %v569, 0.0
      %v640 = vmax.f32 %v574, 0.0
      %v641 = vmax.f32 %v577, 0.0
      %v642 = vmax.f32 %v582, 0.0
      %v643 = vmax.f32 %v585, 0.0
      %v644 = vmax.f32 %v590, 0.0
      %v645 = vmax.f32 %v593, 0.0
      %v646 = vmax.f32 %v598, 0.0
      %v647 = vmax.f32 %v601, 0.0
      %v648 = vmax.f32 %v606, 0.0
      %v649 = vmax.f32 %v609, 0.0
      %v650 = vmax.f32 %v614, 0.0
      %v651 = vmax.f32 %v617, 0.0
      %v652 = vpack.c.bf16 %v621, %v620
      %v653 = vpack.c.bf16 %v623, %v622
      %v654 = vpack.c.bf16 %v625, %v624
      %v655 = vpack.c.bf16 %v627, %v626
      %v656 = vpack.c.bf16 %v629, %v628
      %v657 = vpack.c.bf16 %v631, %v630
      %v658 = vpack.c.bf16 %v633, %v632
      %v659 = vpack.c.bf16 %v635, %v634
      %v660 = vpack.c.bf16 %v637, %v636
      %v661 = vpack.c.bf16 %v639, %v638
      %v662 = vpack.c.bf16 %v641, %v640
      %v663 = vpack.c.bf16 %v643, %v642
      %v664 = vpack.c.bf16 %v645, %v644
      %v665 = vpack.c.bf16 %v647, %v646
      %v666 = vpack.c.bf16 %v649, %v648
      %v667 = vpack.c.bf16 %v651, %v650
      %v668 = vld [vmem:[%s3] sm:$0xf]
      %v669 = vld [vmem:[%s3 + $0x4] sm:$0xf]
      %v670 = vld [vmem:[%s3 + $0x8] sm:$0xf]
      %v671 = vld [vmem:[%s3 + $0xc] sm:$0xf]
      %v672 = vld [vmem:[%s3 + $0x10] sm:$0xf]
      %v673 = vld [vmem:[%s3 + $0x14] sm:$0xf]
      %v674 = vld [vmem:[%s3 + $0x18] sm:$0xf]
      %v675 = vld [vmem:[%s3 + $0x1c] sm:$0xf]
      %v676 = vld [vmem:[%s3 + $0x20] sm:$0xf]
      %v677 = vld [vmem:[%s3 + $0x24] sm:$0xf]
      %v678 = vld [vmem:[%s3 + $0x28] sm:$0xf]
      %v679 = vld [vmem:[%s3 + $0x2c] sm:$0xf]
      %v680 = vld [vmem:[%s3 + $0x30] sm:$0xf]
      %v681 = vld [vmem:[%s3 + $0x34] sm:$0xf]
      %v682 = vld [vmem:[%s3 + $0x38] sm:$0xf]
      %v683 = vld [vmem:[%s3 + $0x3c] sm:$0xf]
      %v684 = vld [vmem:[%s4] sm:$0x1]
      %v686 = vlaneseq
      %v687 = vshrl.u32 %v686, 7
      %v688 = vsub.s32 0, %v687
      %v689 = vrot.slane %v684, %v688
      %v707 = vunpack.c.l.b16 %v668
      %v708 = vunpack.c.l.b16 %v669
      %v709 = vunpack.c.l.b16 %v670
      %v710 = vunpack.c.l.b16 %v671
      %v711 = vunpack.c.l.b16 %v672
      %v712 = vunpack.c.l.b16 %v673
      %v713 = vunpack.c.l.b16 %v674
      %v714 = vunpack.c.l.b16 %v675
      %v715 = vunpack.c.l.b16 %v676
      %v716 = vunpack.c.l.b16 %v677
      %v717 = vunpack.c.l.b16 %v678
      %v718 = vunpack.c.l.b16 %v679
      %v719 = vunpack.c.l.b16 %v680
      %v720 = vunpack.c.l.b16 %v681
      %v721 = vunpack.c.l.b16 %v682
      %v722 = vunpack.c.l.b16 %v683
      %v723 = vpack.c.b16 %v708, %v707
      %v724 = vpack.c.b16 %v710, %v709
      %v725 = vpack.c.b16 %v712, %v711
      %v726 = vpack.c.b16 %v714, %v713
      %v727 = vpack.c.b16 %v716, %v715
      %v728 = vpack.c.b16 %v718, %v717
      %v729 = vpack.c.b16 %v720, %v719
      %v730 = vpack.c.b16 %v722, %v721
      %739 = vmatprep.subr.bf16.mxu0 0
      %740 = vmatpush1.bf16.msra.mxu0 %v723
      %741 = vmatprep.subr.bf16.mxu0 0
      %742 = vmatpush1.bf16.msra.mxu0 %v724
      %743 = vmatprep.subr.bf16.mxu0 0
      %744 = vmatpush1.bf16.msra.mxu0 %v725
      %745 = vmatprep.subr.bf16.mxu0 0
      %746 = vmatpush1.bf16.msra.mxu0 %v726
      %747 = vmatprep.subr.bf16.mxu0 0
      %748 = vmatpush1.bf16.msra.mxu0 %v727
      %749 = vmatprep.subr.bf16.mxu0 0
      %750 = vmatpush1.bf16.msra.mxu0 %v728
      %751 = vmatprep.subr.bf16.mxu0 0
      %752 = vmatpush1.bf16.msra.mxu0 %v729
      %753 = vmatprep.subr.bf16.mxu0 0
      %754 = vmatpush1.bf16.msra.mxu0 %v730
      %755 = vmatprep.subr.bf16.mxu0 0
      %756 = vmatpush1.bf16.msra.mxu0 0
      %757 = vmatprep.subr.bf16.mxu0 0
      %758 = vmatpush1.bf16.msra.mxu0 0
      %759 = vmatprep.subr.bf16.mxu0 0
      %760 = vmatpush1.bf16.msra.mxu0 0
      %761 = vmatprep.subr.bf16.mxu0 0
      %762 = vmatpush1.bf16.msra.mxu0 0
      %763 = vmatprep.subr.bf16.mxu0 0
      %764 = vmatpush1.bf16.msra.mxu0 0
      %765 = vmatprep.subr.bf16.mxu0 0
      %766 = vmatpush1.bf16.msra.mxu0 0
      %767 = vmatprep.subr.bf16.mxu0 0
      %768 = vmatpush1.bf16.msra.mxu0 0
      %769 = vmatprep.subr.bf16.mxu0 0
      %770 = vmatpush1.bf16.msra.mxu0 0
      %771 = vmatprep.mubr.bf16.mxu0 0
      %772 = vmatmul.mubr.bf16.gmra.mrb[0].mxu0 %v652
      %v773 = vpop.f32.mrb[0].mxu0
      %v774 = vadd.f32 %v689, %v773
      %v775 = vpop.f32.mrb[0].mxu0
      %v776 = vpop.f32.mrb[0].mxu0
      %v777 = vadd.f32 %v689, %v776
      %v778 = vpop.f32.mrb[0].mxu0
      %779 = vmatprep.mubr.bf16.mxu0 0
      %780 = vmatmul.mubr.bf16.gmra.mrb[0].mxu0 %v653
      %v781 = vpop.f32.mrb[0].mxu0
      %v782 = vadd.f32 %v689, %v781
      %v783 = vpop.f32.mrb[0].mxu0
      %v784 = vpop.f32.mrb[0].mxu0
      %v785 = vadd.f32 %v689, %v784
      %v786 = vpop.f32.mrb[0].mxu0
      %787 = vmatprep.mubr.bf16.mxu0 0
      %788 = vmatmul.mubr.bf16.gmra.mrb[0].mxu0 %v654
      %v789 = vpop.f32.mrb[0].mxu0
      %v790 = vadd.f32 %v689, %v789
      %v791 = vpop.f32.mrb[0].mxu0
      %v792 = vpop.f32.mrb[0].mxu0
      %v793 = vadd.f32 %v689, %v792
      %v794 = vpop.f32.mrb[0].mxu0
      %795 = vmatprep.mubr.bf16.mxu0 0
      %796 = vmatmul.mubr.bf16.gmra.mrb[0].mxu0 %v655
      %v797 = vpop.f32.mrb[0].mxu0
      %v798 = vadd.f32 %v689, %v797
      %v799 = vpop.f32.mrb[0].mxu0
      %v800 = vpop.f32.mrb[0].mxu0
      %v801 = vadd.f32 %v689, %v800
      %v802 = vpop.f32.mrb[0].mxu0
      %803 = vmatprep.mubr.bf16.mxu0 0
      %804 = vmatmul.mubr.bf16.gmra.mrb[0].mxu0 %v656
      %v805 = vpop.f32.mrb[0].mxu0
      %v806 = vadd.f32 %v689, %v805
      %v807 = vpop.f32.mrb[0].mxu0
      %v808 = vpop.f32.mrb[0].mxu0
      %v809 = vadd.f32 %v689, %v808
      %v810 = vpop.f32.mrb[0].mxu0
      %811 = vmatprep.mubr.bf16.mxu0 0
      %812 = vmatmul.mubr.bf16.gmra.mrb[0].mxu0 %v657
      %v813 = vpop.f32.mrb[0].mxu0
      %v814 = vadd.f32 %v689, %v813
      %v815 = vpop.f32.mrb[0].mxu0
      %v816 = vpop.f32.mrb[0].mxu0
      %v817 = vadd.f32 %v689, %v816
      %v818 = vpop.f32.mrb[0].mxu0
      %819 = vmatprep.mubr.bf16.mxu0 0
      %820 = vmatmul.mubr.bf16.gmra.mrb[0].mxu0 %v658
      %v821 = vpop.f32.mrb[0].mxu0
      %v822 = vadd.f32 %v689, %v821
      %v823 = vpop.f32.mrb[0].mxu0
      %v824 = vpop.f32.mrb[0].mxu0
      %v825 = vadd.f32 %v689, %v824
      %v826 = vpop.f32.mrb[0].mxu0
      %827 = vmatprep.mubr.bf16.mxu0 0
      %828 = vmatmul.mubr.bf16.gmra.mrb[0].mxu0 %v659
      %v829 = vpop.f32.mrb[0].mxu0
      %v830 = vadd.f32 %v689, %v829
      %v831 = vpop.f32.mrb[0].mxu0
      %v832 = vpop.f32.mrb[0].mxu0
      %v833 = vadd.f32 %v689, %v832
      %v834 = vpop.f32.mrb[0].mxu0
      %835 = vmatprep.mubr.bf16.mxu0 0
      %836 = vmatmul.mubr.bf16.gmra.mrb[0].mxu0 %v660
      %v837 = vpop.f32.mrb[0].mxu0
      %v838 = vadd.f32 %v689, %v837
      %v839 = vpop.f32.mrb[0].mxu0
      %v840 = vpop.f32.mrb[0].mxu0
      %v841 = vadd.f32 %v689, %v840
      %v842 = vpop.f32.mrb[0].mxu0
      %843 = vmatprep.mubr.bf16.mxu0 0
      %844 = vmatmul.mubr.bf16.gmra.mrb[0].mxu0 %v661
      %v845 = vpop.f32.mrb[0].mxu0
      %v846 = vadd.f32 %v689, %v845
      %v847 = vpop.f32.mrb[0].mxu0
      %v848 = vpop.f32.mrb[0].mxu0
      %v849 = vadd.f32 %v689, %v848
      %v850 = vpop.f32.mrb[0].mxu0
      %851 = vmatprep.mubr.bf16.mxu0 0
      %852 = vmatmul.mubr.bf16.gmra.mrb[0].mxu0 %v662
      %v853 = vpop.f32.mrb[0].mxu0
      %v854 = vadd.f32 %v689, %v853
      %v855 = vpop.f32.mrb[0].mxu0
      %v856 = vpop.f32.mrb[0].mxu0
      %v857 = vadd.f32 %v689, %v856
      %v858 = vpop.f32.mrb[0].mxu0
      %859 = vmatprep.mubr.bf16.mxu0 0
      %860 = vmatmul.mubr.bf16.gmra.mrb[0].mxu0 %v663
      %v861 = vpop.f32.mrb[0].mxu0
      %v862 = vadd.f32 %v689, %v861
      %v863 = vpop.f32.mrb[0].mxu0
      %v864 = vpop.f32.mrb[0].mxu0
      %v865 = vadd.f32 %v689, %v864
      %v866 = vpop.f32.mrb[0].mxu0
      %867 = vmatprep.mubr.bf16.mxu0 0
      %868 = vmatmul.mubr.bf16.gmra.mrb[0].mxu0 %v664
      %v869 = vpop.f32.mrb[0].mxu0
      %v870 = vadd.f32 %v689, %v869
      %v871 = vpop.f32.mrb[0].mxu0
      %v872 = vpop.f32.mrb[0].mxu0
      %v873 = vadd.f32 %v689, %v872
      %v874 = vpop.f32.mrb[0].mxu0
      %875 = vmatprep.mubr.bf16.mxu0 0
      %876 = vmatmul.mubr.bf16.gmra.mrb[0].mxu0 %v665
      %v877 = vpop.f32.mrb[0].mxu0
      %v878 = vadd.f32 %v689, %v877
      %v879 = vpop.f32.mrb[0].mxu0
      %v880 = vpop.f32.mrb[0].mxu0
      %v881 = vadd.f32 %v689, %v880
      %v882 = vpop.f32.mrb[0].mxu0
      %883 = vmatprep.mubr.bf16.mxu0 0
      %884 = vmatmul.mubr.bf16.gmra.mrb[0].mxu0 %v666
      %v885 = vpop.f32.mrb[0].mxu0
      %v886 = vadd.f32 %v689, %v885
      %v887 = vpop.f32.mrb[0].mxu0
      %v888 = vpop.f32.mrb[0].mxu0
      %v889 = vadd.f32 %v689, %v888
      %v890 = vpop.f32.mrb[0].mxu0
      %891 = vmatprep.mubr.bf16.mxu0 0
      %892 = vmatmul.mubr.bf16.gmra.mrb[0].mxu0 %v667
      %v893 = vpop.f32.mrb[0].mxu0
      %v894 = vadd.f32 %v689, %v893
      %v895 = vpop.f32.mrb[0].mxu0
      %v896 = vpop.f32.mrb[0].mxu0
      %v897 = vadd.f32 %v689, %v896
      %v898 = vpop.f32.mrb[0].mxu0
      %899 = vdwg.mxu0
      %v900 = vmax.f32 %v774, 0.0
      %v901 = vmax.f32 %v777, 0.0
      %v902 = vmax.f32 %v782, 0.0
      %v903 = vmax.f32 %v785, 0.0
      %v904 = vmax.f32 %v790, 0.0
      %v905 = vmax.f32 %v793, 0.0
      %v906 = vmax.f32 %v798, 0.0
      %v907 = vmax.f32 %v801, 0.0
      %v908 = vmax.f32 %v806, 0.0
      %v909 = vmax.f32 %v809, 0.0
      %v910 = vmax.f32 %v814, 0.0
      %v911 = vmax.f32 %v817, 0.0
      %v912 = vmax.f32 %v822, 0.0
      %v913 = vmax.f32 %v825, 0.0
      %v914 = vmax.f32 %v830, 0.0
      %v915 = vmax.f32 %v833, 0.0
      %v916 = vmax.f32 %v838, 0.0
      %v917 = vmax.f32 %v841, 0.0
      %v918 = vmax.f32 %v846, 0.0
      %v919 = vmax.f32 %v849, 0.0
      %v920 = vmax.f32 %v854, 0.0
      %v921 = vmax.f32 %v857, 0.0
      %v922 = vmax.f32 %v862, 0.0
      %v923 = vmax.f32 %v865, 0.0
      %v924 = vmax.f32 %v870, 0.0
      %v925 = vmax.f32 %v873, 0.0
      %v926 = vmax.f32 %v878, 0.0
      %v927 = vmax.f32 %v881, 0.0
      %v928 = vmax.f32 %v886, 0.0
      %v929 = vmax.f32 %v889, 0.0
      %v930 = vmax.f32 %v894, 0.0
      %v931 = vmax.f32 %v897, 0.0
      %v932 = vpack.c.bf16 %v901, %v900
      %v933 = vpack.c.bf16 %v903, %v902
      %v934 = vpack.c.bf16 %v905, %v904
      %v935 = vpack.c.bf16 %v907, %v906
      %v936 = vpack.c.bf16 %v909, %v908
      %v937 = vpack.c.bf16 %v911, %v910
      %v938 = vpack.c.bf16 %v913, %v912
      %v939 = vpack.c.bf16 %v915, %v914
      %v940 = vpack.c.bf16 %v917, %v916
      %v941 = vpack.c.bf16 %v919, %v918
      %v942 = vpack.c.bf16 %v921, %v920
      %v943 = vpack.c.bf16 %v923, %v922
      %v944 = vpack.c.bf16 %v925, %v924
      %v945 = vpack.c.bf16 %v927, %v926
      %v946 = vpack.c.bf16 %v929, %v928
      %v947 = vpack.c.bf16 %v931, %v930
      %v948 = vld [vmem:[%s5] sm:$0xf]
      %v949 = vld [vmem:[%s5 + $0x4] sm:$0xf]
      %v950 = vld [vmem:[%s5 + $0x8] sm:$0xf]
      %v951 = vld [vmem:[%s5 + $0xc] sm:$0xf]
      %v952 = vld [vmem:[%s5 + $0x10] sm:$0xf]
      %v953 = vld [vmem:[%s5 + $0x14] sm:$0xf]
      %v954 = vld [vmem:[%s5 + $0x18] sm:$0xf]
      %v955 = vld [vmem:[%s5 + $0x1c] sm:$0xf]
      %v956 = vld [vmem:[%s6] sm:$0x1]
      %v958 = vlaneseq
      %v959 = vshrl.u32 %v958, 7
      %v960 = vsub.s32 0, %v959
      %v961 = vrot.slane %v956, %v960
      %v971 = vunpack.c.l.b16 %v948
      %v972 = vunpack.c.l.b16 %v949
      %v973 = vunpack.c.l.b16 %v950
      %v974 = vunpack.c.l.b16 %v951
      %v975 = vunpack.c.l.b16 %v952
      %v976 = vunpack.c.l.b16 %v953
      %v977 = vunpack.c.l.b16 %v954
      %v978 = vunpack.c.l.b16 %v955
      %v979 = vpack.c.b16 %v972, %v971
      %v980 = vpack.c.b16 %v974, %v973
      %v981 = vpack.c.b16 %v976, %v975
      %v982 = vpack.c.b16 %v978, %v977
      %vm987 = vcmask 523264
      %v989 = vsel %vm987, %v932, 0
      %v992 = vsel %vm987, %v933, 0
      %v995 = vsel %vm987, %v934, 0
      %v998 = vsel %vm987, %v935, 0
      %v1001 = vsel %vm987, %v936, 0
      %v1004 = vsel %vm987, %v937, 0
      %v1007 = vsel %vm987, %v938, 0
      %v1010 = vsel %vm987, %v939, 0
      %v1013 = vsel %vm987, %v940, 0
      %v1016 = vsel %vm987, %v941, 0
      %v1019 = vsel %vm987, %v942, 0
      %v1022 = vsel %vm987, %v943, 0
      %v1025 = vsel %vm987, %v944, 0
      %v1028 = vsel %vm987, %v945, 0
      %v1031 = vsel %vm987, %v946, 0
      %v1034 = vsel %vm987, %v947, 0
      %1036 = vmatprep.subr.bf16.mxu0 0
      %1037 = vmatpush1.bf16.msra.mxu0 %v979
      %1038 = vmatprep.subr.bf16.mxu0 0
      %1039 = vmatpush1.bf16.msra.mxu0 %v980
      %1040 = vmatprep.subr.bf16.mxu0 0
      %1041 = vmatpush1.bf16.msra.mxu0 %v981
      %1042 = vmatprep.subr.bf16.mxu0 0
      %1043 = vmatpush1.bf16.msra.mxu0 %v982
      %1044 = vmatprep.subr.bf16.mxu0 0
      %1045 = vmatpush1.bf16.msra.mxu0 0
      %1046 = vmatprep.subr.bf16.mxu0 0
      %1047 = vmatpush1.bf16.msra.mxu0 0
      %1048 = vmatprep.subr.bf16.mxu0 0
      %1049 = vmatpush1.bf16.msra.mxu0 0
      %1050 = vmatprep.subr.bf16.mxu0 0
      %1051 = vmatpush1.bf16.msra.mxu0 0
      %1052 = vmatprep.subr.bf16.mxu0 0
      %1053 = vmatpush1.bf16.msra.mxu0 0
      %1054 = vmatprep.subr.bf16.mxu0 0
      %1055 = vmatpush1.bf16.msra.mxu0 0
      %1056 = vmatprep.subr.bf16.mxu0 0
      %1057 = vmatpush1.bf16.msra.mxu0 0
      %1058 = vmatprep.subr.bf16.mxu0 0
      %1059 = vmatpush1.bf16.msra.mxu0 0
      %1060 = vmatprep.subr.bf16.mxu0 0
      %1061 = vmatpush1.bf16.msra.mxu0 0
      %1062 = vmatprep.subr.bf16.mxu0 0
      %1063 = vmatpush1.bf16.msra.mxu0 0
      %1064 = vmatprep.subr.bf16.mxu0 0
      %1065 = vmatpush1.bf16.msra.mxu0 0
      %1066 = vmatprep.subr.bf16.mxu0 0
      %1067 = vmatpush1.bf16.msra.mxu0 0
      %1068 = vmatprep.mubr.bf16.mxu0 0
      %1069 = vmatmul.mubr.bf16.gmra.mrb[0].mxu0 %v989
      %v1070 = vpop.f32.mrb[0].mxu0
      %v1071 = vadd.f32 %v961, %v1070
      %v1072 = vpop.f32.mrb[0].mxu0
      %v1073 = vpop.f32.mrb[0].mxu0
      %v1074 = vadd.f32 %v961, %v1073
      %v1075 = vpop.f32.mrb[0].mxu0
      %1076 = vmatprep.mubr.bf16.mxu0 0
      %1077 = vmatmul.mubr.bf16.gmra.mrb[0].mxu0 %v992
      %v1078 = vpop.f32.mrb[0].mxu0
      %v1079 = vadd.f32 %v961, %v1078
      %v1080 = vpop.f32.mrb[0].mxu0
      %v1081 = vpop.f32.mrb[0].mxu0
      %v1082 = vadd.f32 %v961, %v1081
      %v1083 = vpop.f32.mrb[0].mxu0
      %1084 = vmatprep.mubr.bf16.mxu0 0
      %1085 = vmatmul.mubr.bf16.gmra.mrb[0].mxu0 %v995
      %v1086 = vpop.f32.mrb[0].mxu0
      %v1087 = vadd.f32 %v961, %v1086
      %v1088 = vpop.f32.mrb[0].mxu0
      %v1089 = vpop.f32.mrb[0].mxu0
      %v1090 = vadd.f32 %v961, %v1089
      %v1091 = vpop.f32.mrb[0].mxu0
      %1092 = vmatprep.mubr.bf16.mxu0 0
      %1093 = vmatmul.mubr.bf16.gmra.mrb[0].mxu0 %v998
      %v1094 = vpop.f32.mrb[0].mxu0
      %v1095 = vadd.f32 %v961, %v1094
      %v1096 = vpop.f32.mrb[0].mxu0
      %v1097 = vpop.f32.mrb[0].mxu0
      %v1098 = vadd.f32 %v961, %v1097
      %v1099 = vpop.f32.mrb[0].mxu0
      %1100 = vmatprep.mubr.bf16.mxu0 0
      %1101 = vmatmul.mubr.bf16.gmra.mrb[0].mxu0 %v1001
      %v1102 = vpop.f32.mrb[0].mxu0
      %v1103 = vadd.f32 %v961, %v1102
      %v1104 = vpop.f32.mrb[0].mxu0
      %v1105 = vpop.f32.mrb[0].mxu0
      %v1106 = vadd.f32 %v961, %v1105
      %v1107 = vpop.f32.mrb[0].mxu0
      %1108 = vmatprep.mubr.bf16.mxu0 0
      %1109 = vmatmul.mubr.bf16.gmra.mrb[0].mxu0 %v1004
      %v1110 = vpop.f32.mrb[0].mxu0
      %v1111 = vadd.f32 %v961, %v1110
      %v1112 = vpop.f32.mrb[0].mxu0
      %v1113 = vpop.f32.mrb[0].mxu0
      %v1114 = vadd.f32 %v961, %v1113
      %v1115 = vpop.f32.mrb[0].mxu0
      %1116 = vmatprep.mubr.bf16.mxu0 0
      %1117 = vmatmul.mubr.bf16.gmra.mrb[0].mxu0 %v1007
      %v1118 = vpop.f32.mrb[0].mxu0
      %v1119 = vadd.f32 %v961, %v1118
      %v1120 = vpop.f32.mrb[0].mxu0
      %v1121 = vpop.f32.mrb[0].mxu0
      %v1122 = vadd.f32 %v961, %v1121
      %v1123 = vpop.f32.mrb[0].mxu0
      %1124 = vmatprep.mubr.bf16.mxu0 0
      %1125 = vmatmul.mubr.bf16.gmra.mrb[0].mxu0 %v1010
      %v1126 = vpop.f32.mrb[0].mxu0
      %v1127 = vadd.f32 %v961, %v1126
      %v1128 = vpop.f32.mrb[0].mxu0
      %v1129 = vpop.f32.mrb[0].mxu0
      %v1130 = vadd.f32 %v961, %v1129
      %v1131 = vpop.f32.mrb[0].mxu0
      %1132 = vmatprep.mubr.bf16.mxu0 0
      %1133 = vmatmul.mubr.bf16.gmra.mrb[0].mxu0 %v1013
      %v1134 = vpop.f32.mrb[0].mxu0
      %v1135 = vadd.f32 %v961, %v1134
      %v1136 = vpop.f32.mrb[0].mxu0
      %v1137 = vpop.f32.mrb[0].mxu0
      %v1138 = vadd.f32 %v961, %v1137
      %v1139 = vpop.f32.mrb[0].mxu0
      %1140 = vmatprep.mubr.bf16.mxu0 0
      %1141 = vmatmul.mubr.bf16.gmra.mrb[0].mxu0 %v1016
      %v1142 = vpop.f32.mrb[0].mxu0
      %v1143 = vadd.f32 %v961, %v1142
      %v1144 = vpop.f32.mrb[0].mxu0
      %v1145 = vpop.f32.mrb[0].mxu0
      %v1146 = vadd.f32 %v961, %v1145
      %v1147 = vpop.f32.mrb[0].mxu0
      %1148 = vmatprep.mubr.bf16.mxu0 0
      %1149 = vmatmul.mubr.bf16.gmra.mrb[0].mxu0 %v1019
      %v1150 = vpop.f32.mrb[0].mxu0
      %v1151 = vadd.f32 %v961, %v1150
      %v1152 = vpop.f32.mrb[0].mxu0
      %v1153 = vpop.f32.mrb[0].mxu0
      %v1154 = vadd.f32 %v961, %v1153
      %v1155 = vpop.f32.mrb[0].mxu0
      %1156 = vmatprep.mubr.bf16.mxu0 0
      %1157 = vmatmul.mubr.bf16.gmra.mrb[0].mxu0 %v1022
      %v1158 = vpop.f32.mrb[0].mxu0
      %v1159 = vadd.f32 %v961, %v1158
      %v1160 = vpop.f32.mrb[0].mxu0
      %v1161 = vpop.f32.mrb[0].mxu0
      %v1162 = vadd.f32 %v961, %v1161
      %v1163 = vpop.f32.mrb[0].mxu0
      %1164 = vmatprep.mubr.bf16.mxu0 0
      %1165 = vmatmul.mubr.bf16.gmra.mrb[0].mxu0 %v1025
      %v1166 = vpop.f32.mrb[0].mxu0
      %v1167 = vadd.f32 %v961, %v1166
      %v1168 = vpop.f32.mrb[0].mxu0
      %v1169 = vpop.f32.mrb[0].mxu0
      %v1170 = vadd.f32 %v961, %v1169
      %v1171 = vpop.f32.mrb[0].mxu0
      %1172 = vmatprep.mubr.bf16.mxu0 0
      %1173 = vmatmul.mubr.bf16.gmra.mrb[0].mxu0 %v1028
      %v1174 = vpop.f32.mrb[0].mxu0
      %v1175 = vadd.f32 %v961, %v1174
      %v1176 = vpop.f32.mrb[0].mxu0
      %v1177 = vpop.f32.mrb[0].mxu0
      %v1178 = vadd.f32 %v961, %v1177
      %v1179 = vpop.f32.mrb[0].mxu0
      %1180 = vmatprep.mubr.bf16.mxu0 0
      %1181 = vmatmul.mubr.bf16.gmra.mrb[0].mxu0 %v1031
      %v1182 = vpop.f32.mrb[0].mxu0
      %v1183 = vadd.f32 %v961, %v1182
      %v1184 = vpop.f32.mrb[0].mxu0
      %v1185 = vpop.f32.mrb[0].mxu0
      %v1186 = vadd.f32 %v961, %v1185
      %v1187 = vpop.f32.mrb[0].mxu0
      %1188 = vmatprep.mubr.bf16.mxu0 0
      %1189 = vmatmul.mubr.bf16.gmra.mrb[0].mxu0 %v1034
      %v1190 = vpop.f32.mrb[0].mxu0
      %v1191 = vadd.f32 %v961, %v1190
      %v1192 = vpop.f32.mrb[0].mxu0
      %v1193 = vpop.f32.mrb[0].mxu0
      %v1194 = vadd.f32 %v961, %v1193
      %v1195 = vpop.f32.mrb[0].mxu0
      %1196 = vdwg.mxu0
      %v1197 = vmax.f32 %v1071, 0.0
      %v1198 = vmax.f32 %v1074, 0.0
      %v1199 = vmax.f32 %v1079, 0.0
      %v1200 = vmax.f32 %v1082, 0.0
      %v1201 = vmax.f32 %v1087, 0.0
      %v1202 = vmax.f32 %v1090, 0.0
      %v1203 = vmax.f32 %v1095, 0.0
      %v1204 = vmax.f32 %v1098, 0.0
      %v1205 = vmax.f32 %v1103, 0.0
      %v1206 = vmax.f32 %v1106, 0.0
      %v1207 = vmax.f32 %v1111, 0.0
      %v1208 = vmax.f32 %v1114, 0.0
      %v1209 = vmax.f32 %v1119, 0.0
      %v1210 = vmax.f32 %v1122, 0.0
      %v1211 = vmax.f32 %v1127, 0.0
      %v1212 = vmax.f32 %v1130, 0.0
      %v1213 = vmax.f32 %v1135, 0.0
      %v1214 = vmax.f32 %v1138, 0.0
      %v1215 = vmax.f32 %v1143, 0.0
      %v1216 = vmax.f32 %v1146, 0.0
      %v1217 = vmax.f32 %v1151, 0.0
      %v1218 = vmax.f32 %v1154, 0.0
      %v1219 = vmax.f32 %v1159, 0.0
      %v1220 = vmax.f32 %v1162, 0.0
      %v1221 = vmax.f32 %v1167, 0.0
      %v1222 = vmax.f32 %v1170, 0.0
      %v1223 = vmax.f32 %v1175, 0.0
      %v1224 = vmax.f32 %v1178, 0.0
      %v1225 = vmax.f32 %v1183, 0.0
      %v1226 = vmax.f32 %v1186, 0.0
      %v1227 = vmax.f32 %v1191, 0.0
      %v1228 = vmax.f32 %v1194, 0.0
      %v1229 = vld [vmem:[%s7] sm:$0x1]
      %v1230 = vunpack.c.l.bf16 %v1229
      %v1231 = vlaneseq
      %v1232 = vshrl.u32 %v1231, 7
      %v1233 = vsub.s32 0, %v1232
      %v1234 = vrot.slane %v1230, %v1233
      %v1235 = vmul.f32 %v1197, %v1234
      %v1236 = vmul.f32 %v1198, %v1234
      %v1237 = vmul.f32 %v1199, %v1234
      %v1238 = vmul.f32 %v1200, %v1234
      %v1239 = vmul.f32 %v1201, %v1234
      %v1240 = vmul.f32 %v1202, %v1234
      %v1241 = vmul.f32 %v1203, %v1234
      %v1242 = vmul.f32 %v1204, %v1234
      %v1243 = vmul.f32 %v1205, %v1234
      %v1244 = vmul.f32 %v1206, %v1234
      %v1245 = vmul.f32 %v1207, %v1234
      %v1246 = vmul.f32 %v1208, %v1234
      %v1247 = vmul.f32 %v1209, %v1234
      %v1248 = vmul.f32 %v1210, %v1234
      %v1249 = vmul.f32 %v1211, %v1234
      %v1250 = vmul.f32 %v1212, %v1234
      %v1251 = vmul.f32 %v1213, %v1234
      %v1252 = vmul.f32 %v1214, %v1234
      %v1253 = vmul.f32 %v1215, %v1234
      %v1254 = vmul.f32 %v1216, %v1234
      %v1255 = vmul.f32 %v1217, %v1234
      %v1256 = vmul.f32 %v1218, %v1234
      %v1257 = vmul.f32 %v1219, %v1234
      %v1258 = vmul.f32 %v1220, %v1234
      %v1259 = vmul.f32 %v1221, %v1234
      %v1260 = vmul.f32 %v1222, %v1234
      %v1261 = vmul.f32 %v1223, %v1234
      %v1262 = vmul.f32 %v1224, %v1234
      %v1263 = vmul.f32 %v1225, %v1234
      %v1264 = vmul.f32 %v1226, %v1234
      %v1265 = vmul.f32 %v1227, %v1234
      %v1266 = vmul.f32 %v1228, %v1234
      %v1267 = vsel %vm410, %v1235, 0.0
      %1268 = vadd.xlane.f32.xlu0 %v1267
      %v1269 = vpop.xlane.xlu0 %1268
      %v1270 = vsel %vm410, %v1236, 0.0
      %1271 = vadd.xlane.f32.xlu0 %v1270
      %v1272 = vpop.xlane.xlu0 %1271
      %v1273 = vsel %vm410, %v1237, 0.0
      %1274 = vadd.xlane.f32.xlu0 %v1273
      %v1275 = vpop.xlane.xlu0 %1274
      %v1276 = vsel %vm410, %v1238, 0.0
      %1277 = vadd.xlane.f32.xlu0 %v1276
      %v1278 = vpop.xlane.xlu0 %1277
      %v1279 = vsel %vm410, %v1239, 0.0
      %1280 = vadd.xlane.f32.xlu0 %v1279
      %v1281 = vpop.xlane.xlu0 %1280
      %v1282 = vsel %vm410, %v1240, 0.0
      %1283 = vadd.xlane.f32.xlu0 %v1282
      %v1284 = vpop.xlane.xlu0 %1283
      %v1285 = vsel %vm410, %v1241, 0.0
      %1286 = vadd.xlane.f32.xlu0 %v1285
      %v1287 = vpop.xlane.xlu0 %1286
      %v1288 = vsel %vm410, %v1242, 0.0
      %1289 = vadd.xlane.f32.xlu0 %v1288
      %v1290 = vpop.xlane.xlu0 %1289
      %v1291 = vsel %vm410, %v1243, 0.0
      %1292 = vadd.xlane.f32.xlu0 %v1291
      %v1293 = vpop.xlane.xlu0 %1292
      %v1294 = vsel %vm410, %v1244, 0.0
      %1295 = vadd.xlane.f32.xlu0 %v1294
      %v1296 = vpop.xlane.xlu0 %1295
      %v1297 = vsel %vm410, %v1245, 0.0
      %1298 = vadd.xlane.f32.xlu0 %v1297
      %v1299 = vpop.xlane.xlu0 %1298
      %v1300 = vsel %vm410, %v1246, 0.0
      %1301 = vadd.xlane.f32.xlu0 %v1300
      %v1302 = vpop.xlane.xlu0 %1301
      %v1303 = vsel %vm410, %v1247, 0.0
      %1304 = vadd.xlane.f32.xlu0 %v1303
      %v1305 = vpop.xlane.xlu0 %1304
      %v1306 = vsel %vm410, %v1248, 0.0
      %1307 = vadd.xlane.f32.xlu0 %v1306
      %v1308 = vpop.xlane.xlu0 %1307
      %v1309 = vsel %vm410, %v1249, 0.0
      %1310 = vadd.xlane.f32.xlu0 %v1309
      %v1311 = vpop.xlane.xlu0 %1310
      %v1312 = vsel %vm410, %v1250, 0.0
      %1313 = vadd.xlane.f32.xlu0 %v1312
      %v1314 = vpop.xlane.xlu0 %1313
      %v1315 = vsel %vm410, %v1251, 0.0
      %1316 = vadd.xlane.f32.xlu0 %v1315
      %v1317 = vpop.xlane.xlu0 %1316
      %v1318 = vsel %vm410, %v1252, 0.0
      %1319 = vadd.xlane.f32.xlu0 %v1318
      %v1320 = vpop.xlane.xlu0 %1319
      %v1321 = vsel %vm410, %v1253, 0.0
      %1322 = vadd.xlane.f32.xlu0 %v1321
      %v1323 = vpop.xlane.xlu0 %1322
      %v1324 = vsel %vm410, %v1254, 0.0
      %1325 = vadd.xlane.f32.xlu0 %v1324
      %v1326 = vpop.xlane.xlu0 %1325
      %v1327 = vsel %vm410, %v1255, 0.0
      %1328 = vadd.xlane.f32.xlu0 %v1327
      %v1329 = vpop.xlane.xlu0 %1328
      %v1330 = vsel %vm410, %v1256, 0.0
      %1331 = vadd.xlane.f32.xlu0 %v1330
      %v1332 = vpop.xlane.xlu0 %1331
      %v1333 = vsel %vm410, %v1257, 0.0
      %1334 = vadd.xlane.f32.xlu0 %v1333
      %v1335 = vpop.xlane.xlu0 %1334
      %v1336 = vsel %vm410, %v1258, 0.0
      %1337 = vadd.xlane.f32.xlu0 %v1336
      %v1338 = vpop.xlane.xlu0 %1337
      %v1339 = vsel %vm410, %v1259, 0.0
      %1340 = vadd.xlane.f32.xlu0 %v1339
      %v1341 = vpop.xlane.xlu0 %1340
      %v1342 = vsel %vm410, %v1260, 0.0
      %1343 = vadd.xlane.f32.xlu0 %v1342
      %v1344 = vpop.xlane.xlu0 %1343
      %v1345 = vsel %vm410, %v1261, 0.0
      %1346 = vadd.xlane.f32.xlu0 %v1345
      %v1347 = vpop.xlane.xlu0 %1346
      %v1348 = vsel %vm410, %v1262, 0.0
      %1349 = vadd.xlane.f32.xlu0 %v1348
      %v1350 = vpop.xlane.xlu0 %1349
      %v1351 = vsel %vm410, %v1263, 0.0
      %1352 = vadd.xlane.f32.xlu0 %v1351
      %v1353 = vpop.xlane.xlu0 %1352
      %v1354 = vsel %vm410, %v1264, 0.0
      %1355 = vadd.xlane.f32.xlu0 %v1354
      %v1356 = vpop.xlane.xlu0 %1355
      %v1357 = vsel %vm410, %v1265, 0.0
      %1358 = vadd.xlane.f32.xlu0 %v1357
      %v1359 = vpop.xlane.xlu0 %1358
      %v1360 = vsel %vm410, %v1266, 0.0
      %1361 = vadd.xlane.f32.xlu0 %v1360
      %v1362 = vpop.xlane.xlu0 %1361
      %v1363 = vld [vmem:[#allocation2] sm:$0x1]
      %v1365 = vlaneseq
      %v1366 = vshrl.u32 %v1365, 7
      %v1367 = vsub.s32 0, %v1366
      %v1368 = vrot.slane %v1363, %v1367
      %v1370 = vadd.f32 %v1269, %v1368
      %v1371 = vadd.f32 %v1272, %v1368
      %v1372 = vadd.f32 %v1275, %v1368
      %v1373 = vadd.f32 %v1278, %v1368
      %v1374 = vadd.f32 %v1281, %v1368
      %v1375 = vadd.f32 %v1284, %v1368
      %v1376 = vadd.f32 %v1287, %v1368
      %v1377 = vadd.f32 %v1290, %v1368
      %v1378 = vadd.f32 %v1293, %v1368
      %v1379 = vadd.f32 %v1296, %v1368
      %v1380 = vadd.f32 %v1299, %v1368
      %v1381 = vadd.f32 %v1302, %v1368
      %v1382 = vadd.f32 %v1305, %v1368
      %v1383 = vadd.f32 %v1308, %v1368
      %v1384 = vadd.f32 %v1311, %v1368
      %v1385 = vadd.f32 %v1314, %v1368
      %v1386 = vadd.f32 %v1317, %v1368
      %v1387 = vadd.f32 %v1320, %v1368
      %v1388 = vadd.f32 %v1323, %v1368
      %v1389 = vadd.f32 %v1326, %v1368
      %v1390 = vadd.f32 %v1329, %v1368
      %v1391 = vadd.f32 %v1332, %v1368
      %v1392 = vadd.f32 %v1335, %v1368
      %v1393 = vadd.f32 %v1338, %v1368
      %v1394 = vadd.f32 %v1341, %v1368
      %v1395 = vadd.f32 %v1344, %v1368
      %v1396 = vadd.f32 %v1347, %v1368
      %v1397 = vadd.f32 %v1350, %v1368
      %v1398 = vadd.f32 %v1353, %v1368
      %v1399 = vadd.f32 %v1356, %v1368
      %v1400 = vadd.f32 %v1359, %v1368
      %v1401 = vadd.f32 %v1362, %v1368
      %vm1402 = vcmask 7168
      %1403 = vst.msk [vmem:[%s336] sm:$0xff] %vm1402, %v1370
      %1404 = vst.msk [vmem:[%s336 + $0x8] sm:$0xff] %vm1402, %v1371
      %1405 = vst.msk [vmem:[%s336 + $0x10] sm:$0xff] %vm1402, %v1372
      %1406 = vst.msk [vmem:[%s336 + $0x18] sm:$0xff] %vm1402, %v1373
      %1407 = vst.msk [vmem:[%s336 + $0x20] sm:$0xff] %vm1402, %v1374
      %1408 = vst.msk [vmem:[%s336 + $0x28] sm:$0xff] %vm1402, %v1375
      %1409 = vst.msk [vmem:[%s336 + $0x30] sm:$0xff] %vm1402, %v1376
      %1410 = vst.msk [vmem:[%s336 + $0x38] sm:$0xff] %vm1402, %v1377
      %1411 = vst.msk [vmem:[%s336 + $0x40] sm:$0xff] %vm1402, %v1378
      %1412 = vst.msk [vmem:[%s336 + $0x48] sm:$0xff] %vm1402, %v1379
      %1413 = vst.msk [vmem:[%s336 + $0x50] sm:$0xff] %vm1402, %v1380
      %1414 = vst.msk [vmem:[%s336 + $0x58] sm:$0xff] %vm1402, %v1381
      %1415 = vst.msk [vmem:[%s336 + $0x60] sm:$0xff] %vm1402, %v1382
      %1416 = vst.msk [vmem:[%s336 + $0x68] sm:$0xff] %vm1402, %v1383
      %1417 = vst.msk [vmem:[%s336 + $0x70] sm:$0xff] %vm1402, %v1384
      %1418 = vst.msk [vmem:[%s336 + $0x78] sm:$0xff] %vm1402, %v1385
      %1419 = vst.msk [vmem:[%s336 + $0x80] sm:$0xff] %vm1402, %v1386
      %1420 = vst.msk [vmem:[%s336 + $0x88] sm:$0xff] %vm1402, %v1387
      %1421 = vst.msk [vmem:[%s336 + $0x90] sm:$0xff] %vm1402, %v1388
      %1422 = vst.msk [vmem:[%s336 + $0x98] sm:$0xff] %vm1402, %v1389
      %1423 = vst.msk [vmem:[%s336 + $0xa0] sm:$0xff] %vm1402, %v1390
      %1424 = vst.msk [vmem:[%s336 + $0xa8] sm:$0xff] %vm1402, %v1391
      %1425 = vst.msk [vmem:[%s336 + $0xb0] sm:$0xff] %vm1402, %v1392
      %1426 = vst.msk [vmem:[%s336 + $0xb8] sm:$0xff] %vm1402, %v1393
      %1427 = vst.msk [vmem:[%s336 + $0xc0] sm:$0xff] %vm1402, %v1394
      %1428 = vst.msk [vmem:[%s336 + $0xc8] sm:$0xff] %vm1402, %v1395
      %1429 = vst.msk [vmem:[%s336 + $0xd0] sm:$0xff] %vm1402, %v1396
      %1430 = vst.msk [vmem:[%s336 + $0xd8] sm:$0xff] %vm1402, %v1397
      %1431 = vst.msk [vmem:[%s336 + $0xe0] sm:$0xff] %vm1402, %v1398
      %1432 = vst.msk [vmem:[%s336 + $0xe8] sm:$0xff] %vm1402, %v1399
      %1433 = vst.msk [vmem:[%s336 + $0xf0] sm:$0xff] %vm1402, %v1400
      %1434 = vst.msk [vmem:[%s336 + $0xf8] sm:$0xff] %vm1402, %v1401
      %s1435 = smul.u32 32, %s22
      %p1436 = scmp.lt.s32.totalorder %s1435, 127
      %s1437 = scalar_select %p1436, %s1435, 127
      %s1438 = smul.addr %s1437, 8
      %s1439 = scalar_lea.vmem %s9, %s1438
      // Predicated region
      $region57: #{tpu_custom_call.1} parent=55 // pred_check
        %p1440 = pneg %p234
      $region58: #{tpu_custom_call.1} parent=55 // pred_check_branch
        %1442 = sbr.rel (%p1440) target = $region60
      $region59: #{tpu_custom_call.1} parent=55 // pred_region
        %s1443 = smul.u32 32, %s22
      $region60: #{tpu_custom_call.1} parent=55 // pred_fallthru
        _
    $region56: #{tpu_custom_call.1} parent=5 // pred_fallthru
      _
    %p1444 = scmp.le.s32.totalorder 2, %s17
    // Predicated region
    $region61: #{tpu_custom_call.1} parent=5 // pred_check
      %p1445 = pneg %p1444
    $region62: #{tpu_custom_call.1} parent=5 // pred_check_branch
      %1447 = sbr.rel (%p1445) target = $region64
    $region63: #{tpu_custom_call.1} parent=5 // pred_region
      %s1448 = ssub.s32 %s17, 2
      // Predicated region
      $region65: #{tpu_custom_call.1} parent=63 // pred_check
        %p1449 = pneg %p240
      $region66: #{tpu_custom_call.1} parent=63 // pred_check_branch
        %1451 = sbr.rel (%p1449) target = $region68
      $region67: #{tpu_custom_call.1} parent=63 // pred_region
        %s1452 = smul.u32 32, %s23
        %p1453 = scmp.lt.s32.totalorder %s1452, 127
        %s1454 = scalar_select %p1453, %s1452, 127
        %s1455 = smul.addr %s1454, 8
        %s1456 = scalar_lea.vmem %s9, %s1455
      $region68: #{tpu_custom_call.1} parent=63 // pred_fallthru
        _
    $region64: #{tpu_custom_call.1} parent=5 // pred_fallthru
      _
  $region6: #{tpu_custom_call.1} parent=0 // loop_footer
    %s21 = sadd.s32 1, %s17
  $region7: #{tpu_custom_call.1} parent=0 // loop_footer_branch
    %16 = sbr.rel target = $region3
  $region8: #{tpu_custom_call.1} parent=0 // loop_exit
    _

</llo_original>
